<compile_context>
chip_gen: v5e
topology: v5e:2x2
jax: 0.10.0
libtpu: 0.0.40
codegen_flags: <defaults>
</compile_context>

<pallas_src>
import functools

import jax
import jax.numpy as jnp
import numpy as np
from jax.experimental import pallas as pl
from jax.experimental.pallas import tpu as pltpu

_LANES = 128


def _round_up(x, m):
    return (x + m - 1) // m * m


@functools.lru_cache(maxsize=None)
def _vmem_limit_bytes():
    # Budget roughly half the physical VMEM of the current generation.
    try:
        cap = pltpu.get_tpu_info().vmem_capacity_bytes
    except Exception:
        cap = 64 * 1024 * 1024
    return int(max(32 * 1024 * 1024, min(cap // 2, 96 * 1024 * 1024)))


def _pick_tn(n, wo, wp, cin, cpad, budget_bytes=6 * 1024 * 1024):
    """Largest divisor of N whose double-buffered row blocks fit the budget."""
    per = 2 * (wp * cin * 2 + 2 * wo * cpad * 4 + wo * cin * 4)
    tn = 1
    for cand in range(1, n + 1):
        if n % cand == 0 and cand * per <= budget_bytes:
            tn = cand
    return tn


# ----------------------------- Pallas kernels ------------------------------ #

def _accum_taps(x_ref, w_ref, acc_ref, *, col_off, wo, tn):
    """acc[t] += sum_dx x[t, off_dx : off_dx + wo, :] @ w[3*dy + dx].

    One kernel-row tap (dy == grid axis 2) is accumulated per grid step."""
    k = pl.program_id(2)

    @pl.when(k == 0)
    def _():
        acc_ref[...] = jnp.zeros_like(acc_ref)

    for t in range(tn):
        row = x_ref[t]                                   # (Wp, Cin) bf16
        contrib = None
        for dx, off in enumerate(col_off):
            wk = w_ref[k * 3 + dx]                       # (Cin, Cpad) bf16
            p = jnp.dot(row[off:off + wo], wk,
                        preferred_element_type=jnp.float32)
            contrib = p if contrib is None else contrib + p
        acc_ref[t] += contrib


def _prelu_bn(y, alpha_ref, scale_ref, bias_ref):
    y = jnp.where(y >= 0.0, y, alpha_ref[...] * y)       # per-channel PReLU
    return y * scale_ref[...] + bias_ref[...]            # folded BatchNorm


def _stage_kernel(x_ref, w_ref, alpha_ref, scale_ref, bias_ref, res_ref,
                  o_ref, acc_ref, *, col_off, wo, tn):
    """out = BN(PReLU(conv3x3(x))) + residual (residual supplied as input)."""
    _accum_taps(x_ref, w_ref, acc_ref, col_off=col_off, wo=wo, tn=tn)

    @pl.when(pl.program_id(2) == 2)
    def _():
        y = _prelu_bn(acc_ref[...], alpha_ref, scale_ref, bias_ref)
        o_ref[...] = y + res_ref[...]


def _stage_ds_kernel(x_ref, w_ref, alpha_ref, scale_ref, bias_ref,
                     d_ref, wd_ref, bd_ref, o_ref, acc_ref,
                     *, col_off, wo, tn):
    """out = BN1(PReLU(conv3x3(x))) + (avgpool(x) @ (W1x1*bn_scale) + bn_bias)."""
    _accum_taps(x_ref, w_ref, acc_ref, col_off=col_off, wo=wo, tn=tn)

    @pl.when(pl.program_id(2) == 2)
    def _():
        y = _prelu_bn(acc_ref[...], alpha_ref, scale_ref, bias_ref)
        for t in range(tn):
            r = jnp.dot(d_ref[t], wd_ref[...],
                        preferred_element_type=jnp.float32)   # (Wo, Cpad)
            o_ref[t] = y[t] + r + bd_ref[...]


# ----------------------------- pallas_call glue ----------------------------- #

def _compiler_params():
    return pltpu.CompilerParams(
        dimension_semantics=("parallel", "parallel", "arbitrary"),
        vmem_limit_bytes=_vmem_limit_bytes())


def _run_stage(x_conv, col_off, w_taps, alpha, scale, bias, residual, *, stride):
    n, _hp, wp, cin = x_conv.shape
    _, ho, wo, cpad = residual.shape
    tn = _pick_tn(n, wo, wp, cin, cpad)
    grid = (n // tn, ho, 3)

    kernel = functools.partial(_stage_kernel, col_off=col_off, wo=wo, tn=tn)

    x_spec = pl.BlockSpec((tn, None, wp, cin),
                          lambda b, i, k, s=stride: (b, i * s + k, 0, 0))
    w_spec = pl.BlockSpec(w_taps.shape, lambda b, i, k: (0, 0, 0))
    vec_spec = pl.BlockSpec((1, cpad), lambda b, i, k: (0, 0))
    row_spec = pl.BlockSpec((tn, None, wo, cpad), lambda b, i, k: (b, i, 0, 0))

    cost = pl.CostEstimate(
        flops=2 * n * ho * wo * 9 * cin * cpad,
        transcendentals=0,
        bytes_accessed=int(3 * x_conv.size * x_conv.dtype.itemsize
                           + residual.size * 4
                           + n * ho * wo * cpad * 4
                           + w_taps.size * 2))

    return pl.pallas_call(
        kernel,
        out_shape=jax.ShapeDtypeStruct((n, ho, wo, cpad), jnp.float32),
        grid=grid,
        in_specs=[x_spec, w_spec, vec_spec, vec_spec, vec_spec, row_spec],
        out_specs=row_spec,
        scratch_shapes=[pltpu.VMEM((tn, wo, cpad), jnp.float32)],
        compiler_params=_compiler_params(),
        cost_estimate=cost,
    )(x_conv, w_taps, alpha, scale, bias, residual)


def _run_stage_ds(x_conv, col_off, w_taps, alpha, scale, bias,
                  d, wd_folded, bd, *, stride):
    n, _hp, wp, cin = x_conv.shape
    _, ho, wo, cin_d = d.shape
    cpad = wd_folded.shape[1]
    tn = _pick_tn(n, wo, wp, cin, cpad)
    grid = (n // tn, ho, 3)

    kernel = functools.partial(_stage_ds_kernel, col_off=col_off, wo=wo, tn=tn)

    x_spec = pl.BlockSpec((tn, None, wp, cin),
                          lambda b, i, k, s=stride: (b, i * s + k, 0, 0))
    w_spec = pl.BlockSpec(w_taps.shape, lambda b, i, k: (0, 0, 0))
    vec_spec = pl.BlockSpec((1, cpad), lambda b, i, k: (0, 0))
    d_spec = pl.BlockSpec((tn, None, wo, cin_d), lambda b, i, k: (b, i, 0, 0))
    wd_spec = pl.BlockSpec(wd_folded.shape, lambda b, i, k: (0, 0))
    row_spec = pl.BlockSpec((tn, None, wo, cpad), lambda b, i, k: (b, i, 0, 0))

    cost = pl.CostEstimate(
        flops=2 * n * ho * wo * (9 * cin + cin_d) * cpad,
        transcendentals=0,
        bytes_accessed=int(3 * x_conv.size * x_conv.dtype.itemsize
                           + d.size * 4
                           + n * ho * wo * cpad * 4
                           + w_taps.size * 2 + wd_folded.size * 4))

    return pl.pallas_call(
        kernel,
        out_shape=jax.ShapeDtypeStruct((n, ho, wo, cpad), jnp.float32),
        grid=grid,
        in_specs=[x_spec, w_spec, vec_spec, vec_spec, vec_spec,
                  d_spec, wd_spec, vec_spec],
        out_specs=row_spec,
        scratch_shapes=[pltpu.VMEM((tn, wo, cpad), jnp.float32)],
        compiler_params=_compiler_params(),
        cost_estimate=cost,
    )(x_conv, w_taps, alpha, scale, bias, d, wd_folded, bd)


# --------------------------- parameter preparation -------------------------- #

def _binarize(w):
    # XNOR-style: sign(w) scaled by per-output-channel mean(|w|).
    scale = jnp.mean(jnp.abs(w), axis=(1, 2, 3), keepdims=True)
    return jnp.sign(w) * scale


def _w_taps(w_oihw, cin_pad, cout_pad):
    # [Cout, Cin, 3, 3] -> [9, Cin_pad, Cout_pad]   (tap index = 3*dy + dx)
    cout, cin = w_oihw.shape[0], w_oihw.shape[1]
    w = jnp.transpose(w_oihw, (2, 3, 1, 0)).reshape(9, cin, cout)
    return jnp.pad(w, ((0, 0), (0, cin_pad - cin), (0, cout_pad - cout)))


def _bn_fold(bn, eps=1e-5):
    gamma, beta, mean, var = bn
    scale = gamma / jnp.sqrt(var + eps)
    bias = beta - mean * scale
    return scale.reshape(1, -1), bias.reshape(1, -1)


def _pad_lanes(v, cpad):
    return jnp.pad(v, ((0, 0), (0, cpad - v.shape[-1])))


def _pad_channels(x, cpad):
    return jnp.pad(x, ((0, 0), (0, 0), (0, 0), (0, cpad - x.shape[-1])))


def _avgpool2(x):
    n, h, w, c = x.shape
    return x.reshape(n, h // 2, 2, w // 2, 2, c).mean(axis=(2, 4))


def _prep_conv_input(x_bf16, stride):
    """Pad H/W by 1.  For stride 2, split padded columns by parity so the
    kernel only needs contiguous column slices.  Returns (x_conv, col_offsets),
    col_offsets[dx] = column offset in x_conv for kernel tap dx."""
    xp = jnp.pad(x_bf16, ((0, 0), (1, 1), (1, 1), (0, 0)))
    if stride == 1:
        return xp, (0, 1, 2)
    even = xp[:, :, 0::2, :]                      # padded columns 0, 2, 4, ...
    odd = xp[:, :, 1::2, :]                       # padded columns 1, 3, 5, ...
    return jnp.concatenate([even, odd], axis=2), (0, even.shape[2], 1)


# ------------------------------ block forward ------------------------------- #

def basic_block_forward(x_nchw, params, stride):
    """HQBN BasicBlock forward (inference; BN running stats folded)."""
    assert stride in (1, 2)
    x = jnp.transpose(x_nchw, (0, 2, 3, 1)).astype(jnp.float32)   # NCHW -> NHWC
    n, h, w, cin = x.shape
    c = params["w1"].shape[0]
    cpad = _round_up(c, _LANES)

    # Binarized conv weights, bf16, tap-major, lane-padded output channels.
    w1 = _w_taps(_binarize(params["w1"]), cin, cpad).astype(jnp.bfloat16)
    w2 = _w_taps(_binarize(params["w2"]), cpad, cpad).astype(jnp.bfloat16)
    a1 = _pad_lanes(params["alpha1"].reshape(1, -1), cpad)
    a2 = _pad_lanes(params["alpha2"].reshape(1, -1), cpad)
    s1, b1 = _bn_fold(params["bn1"])
    s2, b2 = _bn_fold(params["bn2"])
    s1, b1 = _pad_lanes(s1, cpad), _pad_lanes(b1, cpad)
    s2, b2 = _pad_lanes(s2, cpad), _pad_lanes(b2, cpad)

    # ---- stage 1: conv1 -> PReLU1 -> BN1 -> (+ residual) ----
    x_conv, col1 = _prep_conv_input(x.astype(jnp.bfloat16), stride)
    if stride != 1 or cin != c:
        # Downsample residual = BN(conv1x1(AvgPool2d(2,2)(x))); like the
        # original PyTorch module, spatial shapes only line up for stride == 2.
        assert stride == 2 and h % 2 == 0 and w % 2 == 0
        d = _avgpool2(x)                                      # (N, Ho, Wo, Cin)
        sd, bd = _bn_fold(params["bnd"])
        wd = params["wd"].reshape(c, cin).T                   # (Cin, C)
        wd_folded = _pad_lanes(wd * sd, cpad)                 # fold BN scale
        bd = _pad_lanes(bd, cpad)
        out1 = _run_stage_ds(x_conv, col1, w1, a1, s1, b1, d, wd_folded, bd,
                             stride=stride)
    else:
        res1 = _pad_channels(x, cpad)                         # identity shortcut
        out1 = _run_stage(x_conv, col1, w1, a1, s1, b1, res1, stride=stride)

    # ---- stage 2: conv2 -> PReLU2 -> BN2 -> (+ out1) ----
    x2_conv, col2 = _prep_conv_input(out1.astype(jnp.bfloat16), 1)
    out2 = _run_stage(x2_conv, col2, w2, a2, s2, b2, out1, stride=1)

    return jnp.transpose(out2[..., :c], (0, 3, 1, 2))         # NHWC -> NCHW


# ------------------------------ pure-JAX reference --------------------------- #

def _conv_ref(x_nhwc, w_oihw, stride, pad):
    return jax.lax.conv_general_dilated(
        x_nhwc, jnp.transpose(w_oihw, (2, 3, 1, 0)),
        window_strides=(stride, stride), padding=[(pad, pad), (pad, pad)],
        dimension_numbers=("NHWC", "HWIO", "NHWC"))


def _q(v):
    # Mirror the kernel's bf16 matmul-operand quantization.
    return v.astype(jnp.bfloat16).astype(jnp.float32)


def ref_forward(x_nchw, params, stride):
    x = jnp.transpose(x_nchw, (0, 2, 3, 1)).astype(jnp.float32)
    cin = x.shape[-1]
    c = params["w1"].shape[0]
    s1, b1 = _bn_fold(params["bn1"])
    s2, b2 = _bn_fold(params["bn2"])

    y = _conv_ref(_q(x), _q(_binarize(params["w1"])), stride, 1)
    y = jnp.where(y >= 0.0, y, params["alpha1"] * y)
    y = y * s1 + b1

    if stride != 1 or cin != c:
        sd, bd = _bn_fold(params["bnd"])
        r = _conv_ref(_avgpool2(x), params["wd"], 1, 0)
        r = r * sd + bd
    else:
        r = x
    out1 = y + r

    y2 = _conv_ref(_q(out1), _q(_binarize(params["w2"])), 1, 1)
    y2 = jnp.where(y2 >= 0.0, y2, params["alpha2"] * y2)
    y2 = y2 * s2 + b2
    return jnp.transpose(y2 + out1, (0, 3, 1, 2))


# ---------------------------------- main ------------------------------------ #

def _init_bn(key, c):
    k1, k2, k3, k4 = jax.random.split(key, 4)
    return (jax.random.uniform(k1, (c,), jnp.float32, 0.5, 1.5),
            0.1 * jax.random.normal(k2, (c,), jnp.float32),
            0.1 * jax.random.normal(k3, (c,), jnp.float32),
            jax.random.uniform(k4, (c,), jnp.float32, 0.5, 1.5))


def _make_params(key, inplanes, planes):
    ks = jax.random.split(key, 6)
    return {
        "w1": 0.1 * jax.random.normal(ks[0], (planes, inplanes, 3, 3), jnp.float32),
        "w2": 0.1 * jax.random.normal(ks[1], (planes, planes, 3, 3), jnp.float32),
        "wd": 0.1 * jax.random.normal(ks[2], (planes, inplanes, 1, 1), jnp.float32),
        "bn1": _init_bn(ks[3], planes),
        "bn2": _init_bn(ks[4], planes),
        "bnd": _init_bn(ks[5], planes),
        "alpha1": jnp.full((planes,), 0.25, jnp.float32),   # PReLU default init
        "alpha2": jnp.full((planes,), 0.25, jnp.float32),
    }


if __name__ == "__main__":
    key = jax.random.PRNGKey(0)
    kp1, kp2, kx1, kx2 = jax.random.split(key, 4)

    fwd = jax.jit(basic_block_forward, static_argnums=2)

    # Config A: downsample block (stride 2, inplanes 4 -> planes 8, 16x16).
    params_a = _make_params(kp1, 4, 8)
    x_a = jax.random.normal(kx1, (2, 4, 16, 16), jnp.float32)
    out_a = jax.block_until_ready(fwd(x_a, params_a, 2))
    ref_a = jax.block_until_ready(ref_forward(x_a, params_a, 2))
    np.testing.assert_allclose(np.asarray(out_a), np.asarray(ref_a),
                               rtol=5e-3, atol=5e-3)

    # Config B: identity-shortcut block (stride 1, planes 8, 16x16).
    params_b = _make_params(kp2, 8, 8)
    x_b = jax.random.normal(kx2, (2, 8, 16, 16), jnp.float32)
    out_b = jax.block_until_ready(fwd(x_b, params_b, 1))
    ref_b = jax.block_until_ready(ref_forward(x_b, params_b, 1))
    np.testing.assert_allclose(np.asarray(out_b), np.asarray(ref_b),
                               rtol=5e-3, atol=5e-3)

    print("KERNEL_OK")
</pallas_src>

<mosaic_0001>
module attributes {stable_mosaic.version = 11 : i64} {
  func.func @_stage_ds_kernel(%arg0: i32, %arg1: i32, %arg2: i32, %arg3: memref<2x1x18x4xbf16, #tpu.memory_space<vmem>>, %arg4: memref<9x4x128xbf16, #tpu.memory_space<vmem>>, %arg5: memref<1x128xf32, #tpu.memory_space<vmem>>, %arg6: memref<1x128xf32, #tpu.memory_space<vmem>>, %arg7: memref<1x128xf32, #tpu.memory_space<vmem>>, %arg8: memref<2x1x8x4xf32, #tpu.memory_space<vmem>>, %arg9: memref<4x128xf32, #tpu.memory_space<vmem>>, %arg10: memref<1x128xf32, #tpu.memory_space<vmem>>, %arg11: memref<2x1x8x128xf32, #tpu.memory_space<vmem>>, %arg12: memref<2x8x128xf32, #tpu.memory_space<vmem>>) attributes {dimension_semantics = [#tpu.dimension_semantics<parallel>, #tpu.dimension_semantics<parallel>, #tpu.dimension_semantics<arbitrary>], iteration_bounds = array<i64: 1, 8, 3>, scalar_prefetch = 0 : i64, scratch_operands = 1 : i64, tpu.core_type = #tpu.core_type<tc>, window_params = [{transform_indices = @transform_0, window_bounds = array<i64: 2, 1, 18, 4>}, {pipeline_mode = #tpu.pipeline_mode<synchronous>, transform_indices = @transform_1, window_bounds = array<i64: 9, 4, 128>}, {pipeline_mode = #tpu.pipeline_mode<synchronous>, transform_indices = @transform_2, window_bounds = array<i64: 1, 128>}, {pipeline_mode = #tpu.pipeline_mode<synchronous>, transform_indices = @transform_3, window_bounds = array<i64: 1, 128>}, {pipeline_mode = #tpu.pipeline_mode<synchronous>, transform_indices = @transform_4, window_bounds = array<i64: 1, 128>}, {transform_indices = @transform_5, window_bounds = array<i64: 2, 1, 8, 4>}, {pipeline_mode = #tpu.pipeline_mode<synchronous>, transform_indices = @transform_6, window_bounds = array<i64: 4, 128>}, {pipeline_mode = #tpu.pipeline_mode<synchronous>, transform_indices = @transform_7, window_bounds = array<i64: 1, 128>}, {transform_indices = @transform_8, window_bounds = array<i64: 2, 1, 8, 128>}]} {
    %c0_i32 = arith.constant 0 : i32
    %0 = arith.cmpi eq, %arg2, %c0_i32 : i32
    %1 = arith.extui %0 : i1 to i32
    %c0_i32_0 = arith.constant 0 : i32
    %2 = arith.cmpi ne, %1, %c0_i32_0 : i32
    scf.if %2 {
      %cst_47 = arith.constant 0.000000e+00 : f32
      %68 = vector.broadcast %cst_47 : f32 to vector<2x8x128xf32>
      %c0_48 = arith.constant 0 : index
      %c0_49 = arith.constant 0 : index
      %c0_50 = arith.constant 0 : index
      %69 = vector.load %arg12[%c0_48, %c0_49, %c0_50] : memref<2x8x128xf32, #tpu.memory_space<vmem>>, vector<2x8x128xf32>
      tpu.vector_store %arg12[%c0_48, %c0_49, %c0_50], %68 {strides = array<i32>} : memref<2x8x128xf32, #tpu.memory_space<vmem>>, vector<2x8x128xf32>,
    } else {
    }
    %c0 = arith.constant 0 : index
    %c0_1 = arith.constant 0 : index
    %c0_2 = arith.constant 0 : index
    %c0_3 = arith.constant 0 : index
    %3 = vector.load %arg3[%c0, %c0_1, %c0_2, %c0_3] : memref<2x1x18x4xbf16, #tpu.memory_space<vmem>>, vector<1x1x18x4xbf16>
    %4 = vector.shape_cast %3 : vector<1x1x18x4xbf16> to vector<18x4xbf16>
    %c3_i32 = arith.constant 3 : i32
    %5 = arith.muli %arg2, %c3_i32 : i32
    %c0_i32_4 = arith.constant 0 : i32
    %6 = arith.addi %5, %c0_i32_4 : i32
    %7 = arith.index_cast %6 : i32 to index
    %c0_5 = arith.constant 0 : index
    %c0_6 = arith.constant 0 : index
    %8 = vector.load %arg4[%7, %c0_5, %c0_6] : memref<9x4x128xbf16, #tpu.memory_space<vmem>>, vector<1x4x128xbf16>
    %9 = vector.shape_cast %8 : vector<1x4x128xbf16> to vector<4x128xbf16>
    %10 = vector.extract_strided_slice %4 {offsets = [0, 0], sizes = [8, 4], strides = [1, 1]} : vector<18x4xbf16> to vector<8x4xbf16>
    %cst = arith.constant dense<0.000000e+00> : vector<8x128xf32>
    %11 = tpu.matmul %10, %9, %cst {dimension_numbers = #tpu.dot_dimension_numbers<[1], [0], [0], [1], [0, 0, 1, 1], [], []>} : vector<8x4xbf16>, vector<4x128xbf16>, vector<8x128xf32> -> vector<8x128xf32>
    %c3_i32_7 = arith.constant 3 : i32
    %12 = arith.muli %arg2, %c3_i32_7 : i32
    %c1_i32 = arith.constant 1 : i32
    %13 = arith.addi %12, %c1_i32 : i32
    %14 = arith.index_cast %13 : i32 to index
    %c0_8 = arith.constant 0 : index
    %c0_9 = arith.constant 0 : index
    %15 = vector.load %arg4[%14, %c0_8, %c0_9] : memref<9x4x128xbf16, #tpu.memory_space<vmem>>, vector<1x4x128xbf16>
    %16 = vector.shape_cast %15 : vector<1x4x128xbf16> to vector<4x128xbf16>
    %17 = vector.extract_strided_slice %4 {offsets = [9, 0], sizes = [8, 4], strides = [1, 1]} : vector<18x4xbf16> to vector<8x4xbf16>
    %cst_10 = arith.constant dense<0.000000e+00> : vector<8x128xf32>
    %18 = tpu.matmul %17, %16, %cst_10 {dimension_numbers = #tpu.dot_dimension_numbers<[1], [0], [0], [1], [0, 0, 1, 1], [], []>} : vector<8x4xbf16>, vector<4x128xbf16>, vector<8x128xf32> -> vector<8x128xf32>
    %19 = arith.addf %11, %18 : vector<8x128xf32>
    %c3_i32_11 = arith.constant 3 : i32
    %20 = arith.muli %arg2, %c3_i32_11 : i32
    %c2_i32 = arith.constant 2 : i32
    %21 = arith.addi %20, %c2_i32 : i32
    %22 = arith.index_cast %21 : i32 to index
    %c0_12 = arith.constant 0 : index
    %c0_13 = arith.constant 0 : index
    %23 = vector.load %arg4[%22, %c0_12, %c0_13] : memref<9x4x128xbf16, #tpu.memory_space<vmem>>, vector<1x4x128xbf16>
    %24 = vector.shape_cast %23 : vector<1x4x128xbf16> to vector<4x128xbf16>
    %25 = vector.extract_strided_slice %4 {offsets = [1, 0], sizes = [8, 4], strides = [1, 1]} : vector<18x4xbf16> to vector<8x4xbf16>
    %cst_14 = arith.constant dense<0.000000e+00> : vector<8x128xf32>
    %26 = tpu.matmul %25, %24, %cst_14 {dimension_numbers = #tpu.dot_dimension_numbers<[1], [0], [0], [1], [0, 0, 1, 1], [], []>} : vector<8x4xbf16>, vector<4x128xbf16>, vector<8x128xf32> -> vector<8x128xf32>
    %27 = arith.addf %19, %26 : vector<8x128xf32>
    %c0_15 = arith.constant 0 : index
    %c0_16 = arith.constant 0 : index
    %c0_17 = arith.constant 0 : index
    %28 = vector.load %arg12[%c0_15, %c0_16, %c0_17] : memref<2x8x128xf32, #tpu.memory_space<vmem>>, vector<1x8x128xf32>
    %29 = vector.shape_cast %28 : vector<1x8x128xf32> to vector<8x128xf32>
    %30 = arith.addf %29, %27 : vector<8x128xf32>
    %c0_18 = arith.constant 0 : index
    %c0_19 = arith.constant 0 : index
    %c0_20 = arith.constant 0 : index
    %31 = vector.load %arg12[%c0_18, %c0_19, %c0_20] : memref<2x8x128xf32, #tpu.memory_space<vmem>>, vector<1x8x128xf32>
    %32 = vector.shape_cast %31 : vector<1x8x128xf32> to vector<8x128xf32>
    %33 = vector.shape_cast %30 : vector<8x128xf32> to vector<1x8x128xf32>
    tpu.vector_store %arg12[%c0_18, %c0_19, %c0_20], %33 {strides = array<i32>} : memref<2x8x128xf32, #tpu.memory_space<vmem>>, vector<1x8x128xf32>,
    %c1 = arith.constant 1 : index
    %c0_21 = arith.constant 0 : index
    %c0_22 = arith.constant 0 : index
    %c0_23 = arith.constant 0 : index
    %34 = vector.load %arg3[%c1, %c0_21, %c0_22, %c0_23] : memref<2x1x18x4xbf16, #tpu.memory_space<vmem>>, vector<1x1x18x4xbf16>
    %35 = vector.shape_cast %34 : vector<1x1x18x4xbf16> to vector<18x4xbf16>
    %c3_i32_24 = arith.constant 3 : i32
    %36 = arith.muli %arg2, %c3_i32_24 : i32
    %c0_i32_25 = arith.constant 0 : i32
    %37 = arith.addi %36, %c0_i32_25 : i32
    %38 = arith.index_cast %37 : i32 to index
    %c0_26 = arith.constant 0 : index
    %c0_27 = arith.constant 0 : index
    %39 = vector.load %arg4[%38, %c0_26, %c0_27] : memref<9x4x128xbf16, #tpu.memory_space<vmem>>, vector<1x4x128xbf16>
    %40 = vector.shape_cast %39 : vector<1x4x128xbf16> to vector<4x128xbf16>
    %41 = vector.extract_strided_slice %35 {offsets = [0, 0], sizes = [8, 4], strides = [1, 1]} : vector<18x4xbf16> to vector<8x4xbf16>
    %cst_28 = arith.constant dense<0.000000e+00> : vector<8x128xf32>
    %42 = tpu.matmul %41, %40, %cst_28 {dimension_numbers = #tpu.dot_dimension_numbers<[1], [0], [0], [1], [0, 0, 1, 1], [], []>} : vector<8x4xbf16>, vector<4x128xbf16>, vector<8x128xf32> -> vector<8x128xf32>
    %c3_i32_29 = arith.constant 3 : i32
    %43 = arith.muli %arg2, %c3_i32_29 : i32
    %c1_i32_30 = arith.constant 1 : i32
    %44 = arith.addi %43, %c1_i32_30 : i32
    %45 = arith.index_cast %44 : i32 to index
    %c0_31 = arith.constant 0 : index
    %c0_32 = arith.constant 0 : index
    %46 = vector.load %arg4[%45, %c0_31, %c0_32] : memref<9x4x128xbf16, #tpu.memory_space<vmem>>, vector<1x4x128xbf16>
    %47 = vector.shape_cast %46 : vector<1x4x128xbf16> to vector<4x128xbf16>
    %48 = vector.extract_strided_slice %35 {offsets = [9, 0], sizes = [8, 4], strides = [1, 1]} : vector<18x4xbf16> to vector<8x4xbf16>
    %cst_33 = arith.constant dense<0.000000e+00> : vector<8x128xf32>
    %49 = tpu.matmul %48, %47, %cst_33 {dimension_numbers = #tpu.dot_dimension_numbers<[1], [0], [0], [1], [0, 0, 1, 1], [], []>} : vector<8x4xbf16>, vector<4x128xbf16>, vector<8x128xf32> -> vector<8x128xf32>
    %50 = arith.addf %42, %49 : vector<8x128xf32>
    %c3_i32_34 = arith.constant 3 : i32
    %51 = arith.muli %arg2, %c3_i32_34 : i32
    %c2_i32_35 = arith.constant 2 : i32
    %52 = arith.addi %51, %c2_i32_35 : i32
    %53 = arith.index_cast %52 : i32 to index
    %c0_36 = arith.constant 0 : index
    %c0_37 = arith.constant 0 : index
    %54 = vector.load %arg4[%53, %c0_36, %c0_37] : memref<9x4x128xbf16, #tpu.memory_space<vmem>>, vector<1x4x128xbf16>
    %55 = vector.shape_cast %54 : vector<1x4x128xbf16> to vector<4x128xbf16>
    %56 = vector.extract_strided_slice %35 {offsets = [1, 0], sizes = [8, 4], strides = [1, 1]} : vector<18x4xbf16> to vector<8x4xbf16>
    %cst_38 = arith.constant dense<0.000000e+00> : vector<8x128xf32>
    %57 = tpu.matmul %56, %55, %cst_38 {dimension_numbers = #tpu.dot_dimension_numbers<[1], [0], [0], [1], [0, 0, 1, 1], [], []>} : vector<8x4xbf16>, vector<4x128xbf16>, vector<8x128xf32> -> vector<8x128xf32>
    %58 = arith.addf %50, %57 : vector<8x128xf32>
    %c1_39 = arith.constant 1 : index
    %c0_40 = arith.constant 0 : index
    %c0_41 = arith.constant 0 : index
    %59 = vector.load %arg12[%c1_39, %c0_40, %c0_41] : memref<2x8x128xf32, #tpu.memory_space<vmem>>, vector<1x8x128xf32>
    %60 = vector.shape_cast %59 : vector<1x8x128xf32> to vector<8x128xf32>
    %61 = arith.addf %60, %58 : vector<8x128xf32>
    %c1_42 = arith.constant 1 : index
    %c0_43 = arith.constant 0 : index
    %c0_44 = arith.constant 0 : index
    %62 = vector.load %arg12[%c1_42, %c0_43, %c0_44] : memref<2x8x128xf32, #tpu.memory_space<vmem>>, vector<1x8x128xf32>
    %63 = vector.shape_cast %62 : vector<1x8x128xf32> to vector<8x128xf32>
    %64 = vector.shape_cast %61 : vector<8x128xf32> to vector<1x8x128xf32>
    tpu.vector_store %arg12[%c1_42, %c0_43, %c0_44], %64 {strides = array<i32>} : memref<2x8x128xf32, #tpu.memory_space<vmem>>, vector<1x8x128xf32>,
    %c2_i32_45 = arith.constant 2 : i32
    %65 = arith.cmpi eq, %arg2, %c2_i32_45 : i32
    %66 = arith.extui %65 : i1 to i32
    %c0_i32_46 = arith.constant 0 : i32
    %67 = arith.cmpi ne, %66, %c0_i32_46 : i32
    scf.if %67 {
      %c0_47 = arith.constant 0 : index
      %c0_48 = arith.constant 0 : index
      %c0_49 = arith.constant 0 : index
      %68 = vector.load %arg12[%c0_47, %c0_48, %c0_49] : memref<2x8x128xf32, #tpu.memory_space<vmem>>, vector<2x8x128xf32>
      %cst_50 = arith.constant 0.000000e+00 : f32
      %69 = vector.broadcast %cst_50 : f32 to vector<2x8x128xf32>
      %70 = arith.cmpf oge, %68, %69 : vector<2x8x128xf32>
      %c0_51 = arith.constant 0 : index
      %c0_52 = arith.constant 0 : index
      %71 = vector.load %arg5[%c0_51, %c0_52] : memref<1x128xf32, #tpu.memory_space<vmem>>, vector<1x128xf32>
      %72 = vector.shape_cast %71 : vector<1x128xf32> to vector<1x1x128xf32>
      %73 = vector.broadcast %72 : vector<1x1x128xf32> to vector<2x8x128xf32>
      %74 = arith.mulf %73, %68 : vector<2x8x128xf32>
      %75 = arith.select %70, %68, %74 : vector<2x8x128xi1>, vector<2x8x128xf32>
      %c0_53 = arith.constant 0 : index
      %c0_54 = arith.constant 0 : index
      %76 = vector.load %arg6[%c0_53, %c0_54] : memref<1x128xf32, #tpu.memory_space<vmem>>, vector<1x128xf32>
      %77 = vector.shape_cast %76 : vector<1x128xf32> to vector<1x1x128xf32>
      %78 = vector.broadcast %77 : vector<1x1x128xf32> to vector<2x8x128xf32>
      %79 = arith.mulf %75, %78 : vector<2x8x128xf32>
      %c0_55 = arith.constant 0 : index
      %c0_56 = arith.constant 0 : index
      %80 = vector.load %arg7[%c0_55, %c0_56] : memref<1x128xf32, #tpu.memory_space<vmem>>, vector<1x128xf32>
      %81 = vector.shape_cast %80 : vector<1x128xf32> to vector<1x1x128xf32>
      %82 = vector.broadcast %81 : vector<1x1x128xf32> to vector<2x8x128xf32>
      %83 = arith.addf %79, %82 : vector<2x8x128xf32>
      %c0_57 = arith.constant 0 : index
      %c0_58 = arith.constant 0 : index
      %c0_59 = arith.constant 0 : index
      %c0_60 = arith.constant 0 : index
      %84 = vector.load %arg8[%c0_57, %c0_58, %c0_59, %c0_60] : memref<2x1x8x4xf32, #tpu.memory_space<vmem>>, vector<1x1x8x4xf32>
      %85 = vector.shape_cast %84 : vector<1x1x8x4xf32> to vector<8x4xf32>
      %c0_61 = arith.constant 0 : index
      %c0_62 = arith.constant 0 : index
      %86 = vector.load %arg9[%c0_61, %c0_62] : memref<4x128xf32, #tpu.memory_space<vmem>>, vector<4x128xf32>
      %cst_63 = arith.constant dense<0.000000e+00> : vector<8x128xf32>
      %87 = tpu.matmul %85, %86, %cst_63 {dimension_numbers = #tpu.dot_dimension_numbers<[1], [0], [0], [1], [0, 0, 1, 1], [], []>} : vector<8x4xf32>, vector<4x128xf32>, vector<8x128xf32> -> vector<8x128xf32>
      %88 = vector.extract_strided_slice %83 {offsets = [0, 0, 0], sizes = [1, 8, 128], strides = [1, 1, 1]} : vector<2x8x128xf32> to vector<1x8x128xf32>
      %89 = vector.shape_cast %88 : vector<1x8x128xf32> to vector<8x128xf32>
      %90 = arith.addf %89, %87 : vector<8x128xf32>
      %c0_64 = arith.constant 0 : index
      %c0_65 = arith.constant 0 : index
      %91 = vector.load %arg10[%c0_64, %c0_65] : memref<1x128xf32, #tpu.memory_space<vmem>>, vector<1x128xf32>
      %92 = vector.broadcast %91 : vector<1x128xf32> to vector<8x128xf32>
      %93 = arith.addf %90, %92 : vector<8x128xf32>
      %c0_66 = arith.constant 0 : index
      %c0_67 = arith.constant 0 : index
      %c0_68 = arith.constant 0 : index
      %c0_69 = arith.constant 0 : index
      %94 = vector.load %arg11[%c0_66, %c0_67, %c0_68, %c0_69] : memref<2x1x8x128xf32, #tpu.memory_space<vmem>>, vector<1x1x8x128xf32>
      %95 = vector.shape_cast %94 : vector<1x1x8x128xf32> to vector<8x128xf32>
      %96 = vector.shape_cast %93 : vector<8x128xf32> to vector<1x1x8x128xf32>
      tpu.vector_store %arg11[%c0_66, %c0_67, %c0_68, %c0_69], %96 {strides = array<i32>} : memref<2x1x8x128xf32, #tpu.memory_space<vmem>>, vector<1x1x8x128xf32>,
      %c1_70 = arith.constant 1 : index
      %c0_71 = arith.constant 0 : index
      %c0_72 = arith.constant 0 : index
      %c0_73 = arith.constant 0 : index
      %97 = vector.load %arg8[%c1_70, %c0_71, %c0_72, %c0_73] : memref<2x1x8x4xf32, #tpu.memory_space<vmem>>, vector<1x1x8x4xf32>
      %98 = vector.shape_cast %97 : vector<1x1x8x4xf32> to vector<8x4xf32>
      %c0_74 = arith.constant 0 : index
      %c0_75 = arith.constant 0 : index
      %99 = vector.load %arg9[%c0_74, %c0_75] : memref<4x128xf32, #tpu.memory_space<vmem>>, vector<4x128xf32>
      %cst_76 = arith.constant dense<0.000000e+00> : vector<8x128xf32>
      %100 = tpu.matmul %98, %99, %cst_76 {dimension_numbers = #tpu.dot_dimension_numbers<[1], [0], [0], [1], [0, 0, 1, 1], [], []>} : vector<8x4xf32>, vector<4x128xf32>, vector<8x128xf32> -> vector<8x128xf32>
      %101 = vector.extract_strided_slice %83 {offsets = [1, 0, 0], sizes = [1, 8, 128], strides = [1, 1, 1]} : vector<2x8x128xf32> to vector<1x8x128xf32>
      %102 = vector.shape_cast %101 : vector<1x8x128xf32> to vector<8x128xf32>
      %103 = arith.addf %102, %100 : vector<8x128xf32>
      %c0_77 = arith.constant 0 : index
      %c0_78 = arith.constant 0 : index
      %104 = vector.load %arg10[%c0_77, %c0_78] : memref<1x128xf32, #tpu.memory_space<vmem>>, vector<1x128xf32>
      %105 = vector.broadcast %104 : vector<1x128xf32> to vector<8x128xf32>
      %106 = arith.addf %103, %105 : vector<8x128xf32>
      %c1_79 = arith.constant 1 : index
      %c0_80 = arith.constant 0 : index
      %c0_81 = arith.constant 0 : index
      %c0_82 = arith.constant 0 : index
      %107 = vector.load %arg11[%c1_79, %c0_80, %c0_81, %c0_82] : memref<2x1x8x128xf32, #tpu.memory_space<vmem>>, vector<1x1x8x128xf32>
      %108 = vector.shape_cast %107 : vector<1x1x8x128xf32> to vector<8x128xf32>
      %109 = vector.shape_cast %106 : vector<8x128xf32> to vector<1x1x8x128xf32>
      tpu.vector_store %arg11[%c1_79, %c0_80, %c0_81, %c0_82], %109 {strides = array<i32>} : memref<2x1x8x128xf32, #tpu.memory_space<vmem>>, vector<1x1x8x128xf32>,
    } else {
    }
    return
  }
  func.func @transform_0(%arg0: i32, %arg1: i32, %arg2: i32) -> (i32, i32, i32, i32) {
    %c2_i32 = arith.constant 2 : i32
    %0 = arith.muli %arg1, %c2_i32 : i32
    %1 = arith.addi %0, %arg2 : i32
    %c0_i32 = arith.constant 0 : i32
    %c0_i32_0 = arith.constant 0 : i32
    %c0_i32_1 = arith.constant 0 : i32
    return %arg0, %1, %c0_i32, %c0_i32_0 : i32, i32, i32, i32
  }
  func.func @transform_1(%arg0: i32, %arg1: i32, %arg2: i32) -> (i32, i32, i32) {
    %c0_i32 = arith.constant 0 : i32
    %c0_i32_0 = arith.constant 0 : i32
    %c0_i32_1 = arith.constant 0 : i32
    %c0_i32_2 = arith.constant 0 : i32
    return %c0_i32, %c0_i32_0, %c0_i32_1 : i32, i32, i32
  }
  func.func @transform_2(%arg0: i32, %arg1: i32, %arg2: i32) -> (i32, i32) {
    %c0_i32 = arith.constant 0 : i32
    %c0_i32_0 = arith.constant 0 : i32
    %c0_i32_1 = arith.constant 0 : i32
    return %c0_i32, %c0_i32_0 : i32, i32
  }
  func.func @transform_3(%arg0: i32, %arg1: i32, %arg2: i32) -> (i32, i32) {
    %c0_i32 = arith.constant 0 : i32
    %c0_i32_0 = arith.constant 0 : i32
    %c0_i32_1 = arith.constant 0 : i32
    return %c0_i32, %c0_i32_0 : i32, i32
  }
  func.func @transform_4(%arg0: i32, %arg1: i32, %arg2: i32) -> (i32, i32) {
    %c0_i32 = arith.constant 0 : i32
    %c0_i32_0 = arith.constant 0 : i32
    %c0_i32_1 = arith.constant 0 : i32
    return %c0_i32, %c0_i32_0 : i32, i32
  }
  func.func @transform_5(%arg0: i32, %arg1: i32, %arg2: i32) -> (i32, i32, i32, i32) {
    %c0_i32 = arith.constant 0 : i32
    %c0_i32_0 = arith.constant 0 : i32
    %c0_i32_1 = arith.constant 0 : i32
    return %arg0, %arg1, %c0_i32, %c0_i32_0 : i32, i32, i32, i32
  }
  func.func @transform_6(%arg0: i32, %arg1: i32, %arg2: i32) -> (i32, i32) {
    %c0_i32 = arith.constant 0 : i32
    %c0_i32_0 = arith.constant 0 : i32
    %c0_i32_1 = arith.constant 0 : i32
    return %c0_i32, %c0_i32_0 : i32, i32
  }
  func.func @transform_7(%arg0: i32, %arg1: i32, %arg2: i32) -> (i32, i32) {
    %c0_i32 = arith.constant 0 : i32
    %c0_i32_0 = arith.constant 0 : i32
    %c0_i32_1 = arith.constant 0 : i32
    return %c0_i32, %c0_i32_0 : i32, i32
  }
  func.func @transform_8(%arg0: i32, %arg1: i32, %arg2: i32) -> (i32, i32, i32, i32) {
    %c0_i32 = arith.constant 0 : i32
    %c0_i32_0 = arith.constant 0 : i32
    %c0_i32_1 = arith.constant 0 : i32
    return %arg0, %arg1, %c0_i32, %c0_i32_0 : i32, i32, i32, i32
  }
}

module attributes {stable_mosaic.version = 11 : i64} {
  func.func @_stage_kernel(%arg0: i32, %arg1: i32, %arg2: i32, %arg3: memref<2x1x10x128xbf16, #tpu.memory_space<vmem>>, %arg4: memref<9x128x128xbf16, #tpu.memory_space<vmem>>, %arg5: memref<1x128xf32, #tpu.memory_space<vmem>>, %arg6: memref<1x128xf32, #tpu.memory_space<vmem>>, %arg7: memref<1x128xf32, #tpu.memory_space<vmem>>, %arg8: memref<2x1x8x128xf32, #tpu.memory_space<vmem>>, %arg9: memref<2x1x8x128xf32, #tpu.memory_space<vmem>>, %arg10: memref<2x8x128xf32, #tpu.memory_space<vmem>>) attributes {dimension_semantics = [#tpu.dimension_semantics<parallel>, #tpu.dimension_semantics<parallel>, #tpu.dimension_semantics<arbitrary>], iteration_bounds = array<i64: 1, 8, 3>, scalar_prefetch = 0 : i64, scratch_operands = 1 : i64, tpu.core_type = #tpu.core_type<tc>, window_params = [{transform_indices = @transform_0, window_bounds = array<i64: 2, 1, 10, 128>}, {pipeline_mode = #tpu.pipeline_mode<synchronous>, transform_indices = @transform_1, window_bounds = array<i64: 9, 128, 128>}, {pipeline_mode = #tpu.pipeline_mode<synchronous>, transform_indices = @transform_2, window_bounds = array<i64: 1, 128>}, {pipeline_mode = #tpu.pipeline_mode<synchronous>, transform_indices = @transform_3, window_bounds = array<i64: 1, 128>}, {pipeline_mode = #tpu.pipeline_mode<synchronous>, transform_indices = @transform_4, window_bounds = array<i64: 1, 128>}, {transform_indices = @transform_5, window_bounds = array<i64: 2, 1, 8, 128>}, {transform_indices = @transform_6, window_bounds = array<i64: 2, 1, 8, 128>}]} {
    %c0_i32 = arith.constant 0 : i32
    %0 = arith.cmpi eq, %arg2, %c0_i32 : i32
    %1 = arith.extui %0 : i1 to i32
    %c0_i32_0 = arith.constant 0 : i32
    %2 = arith.cmpi ne, %1, %c0_i32_0 : i32
    scf.if %2 {
      %cst_47 = arith.constant 0.000000e+00 : f32
      %68 = vector.broadcast %cst_47 : f32 to vector<2x8x128xf32>
      %c0_48 = arith.constant 0 : index
      %c0_49 = arith.constant 0 : index
      %c0_50 = arith.constant 0 : index
      %69 = vector.load %arg10[%c0_48, %c0_49, %c0_50] : memref<2x8x128xf32, #tpu.memory_space<vmem>>, vector<2x8x128xf32>
      tpu.vector_store %arg10[%c0_48, %c0_49, %c0_50], %68 {strides = array<i32>} : memref<2x8x128xf32, #tpu.memory_space<vmem>>, vector<2x8x128xf32>,
    } else {
    }
    %c0 = arith.constant 0 : index
    %c0_1 = arith.constant 0 : index
    %c0_2 = arith.constant 0 : index
    %c0_3 = arith.constant 0 : index
    %3 = vector.load %arg3[%c0, %c0_1, %c0_2, %c0_3] : memref<2x1x10x128xbf16, #tpu.memory_space<vmem>>, vector<1x1x10x128xbf16>
    %4 = vector.shape_cast %3 : vector<1x1x10x128xbf16> to vector<10x128xbf16>
    %c3_i32 = arith.constant 3 : i32
    %5 = arith.muli %arg2, %c3_i32 : i32
    %c0_i32_4 = arith.constant 0 : i32
    %6 = arith.addi %5, %c0_i32_4 : i32
    %7 = arith.index_cast %6 : i32 to index
    %c0_5 = arith.constant 0 : index
    %c0_6 = arith.constant 0 : index
    %8 = vector.load %arg4[%7, %c0_5, %c0_6] : memref<9x128x128xbf16, #tpu.memory_space<vmem>>, vector<1x128x128xbf16>
    %9 = vector.shape_cast %8 : vector<1x128x128xbf16> to vector<128x128xbf16>
    %10 = vector.extract_strided_slice %4 {offsets = [0, 0], sizes = [8, 128], strides = [1, 1]} : vector<10x128xbf16> to vector<8x128xbf16>
    %cst = arith.constant dense<0.000000e+00> : vector<8x128xf32>
    %11 = tpu.matmul %10, %9, %cst {dimension_numbers = #tpu.dot_dimension_numbers<[1], [0], [0], [1], [0, 0, 1, 1], [], []>} : vector<8x128xbf16>, vector<128x128xbf16>, vector<8x128xf32> -> vector<8x128xf32>
    %c3_i32_7 = arith.constant 3 : i32
    %12 = arith.muli %arg2, %c3_i32_7 : i32
    %c1_i32 = arith.constant 1 : i32
    %13 = arith.addi %12, %c1_i32 : i32
    %14 = arith.index_cast %13 : i32 to index
    %c0_8 = arith.constant 0 : index
    %c0_9 = arith.constant 0 : index
    %15 = vector.load %arg4[%14, %c0_8, %c0_9] : memref<9x128x128xbf16, #tpu.memory_space<vmem>>, vector<1x128x128xbf16>
    %16 = vector.shape_cast %15 : vector<1x128x128xbf16> to vector<128x128xbf16>
    %17 = vector.extract_strided_slice %4 {offsets = [1, 0], sizes = [8, 128], strides = [1, 1]} : vector<10x128xbf16> to vector<8x128xbf16>
    %cst_10 = arith.constant dense<0.000000e+00> : vector<8x128xf32>
    %18 = tpu.matmul %17, %16, %cst_10 {dimension_numbers = #tpu.dot_dimension_numbers<[1], [0], [0], [1], [0, 0, 1, 1], [], []>} : vector<8x128xbf16>, vector<128x128xbf16>, vector<8x128xf32> -> vector<8x128xf32>
    %19 = arith.addf %11, %18 : vector<8x128xf32>
    %c3_i32_11 = arith.constant 3 : i32
    %20 = arith.muli %arg2, %c3_i32_11 : i32
    %c2_i32 = arith.constant 2 : i32
    %21 = arith.addi %20, %c2_i32 : i32
    %22 = arith.index_cast %21 : i32 to index
    %c0_12 = arith.constant 0 : index
    %c0_13 = arith.constant 0 : index
    %23 = vector.load %arg4[%22, %c0_12, %c0_13] : memref<9x128x128xbf16, #tpu.memory_space<vmem>>, vector<1x128x128xbf16>
    %24 = vector.shape_cast %23 : vector<1x128x128xbf16> to vector<128x128xbf16>
    %25 = vector.extract_strided_slice %4 {offsets = [2, 0], sizes = [8, 128], strides = [1, 1]} : vector<10x128xbf16> to vector<8x128xbf16>
    %cst_14 = arith.constant dense<0.000000e+00> : vector<8x128xf32>
    %26 = tpu.matmul %25, %24, %cst_14 {dimension_numbers = #tpu.dot_dimension_numbers<[1], [0], [0], [1], [0, 0, 1, 1], [], []>} : vector<8x128xbf16>, vector<128x128xbf16>, vector<8x128xf32> -> vector<8x128xf32>
    %27 = arith.addf %19, %26 : vector<8x128xf32>
    %c0_15 = arith.constant 0 : index
    %c0_16 = arith.constant 0 : index
    %c0_17 = arith.constant 0 : index
    %28 = vector.load %arg10[%c0_15, %c0_16, %c0_17] : memref<2x8x128xf32, #tpu.memory_space<vmem>>, vector<1x8x128xf32>
    %29 = vector.shape_cast %28 : vector<1x8x128xf32> to vector<8x128xf32>
    %30 = arith.addf %29, %27 : vector<8x128xf32>
    %c0_18 = arith.constant 0 : index
    %c0_19 = arith.constant 0 : index
    %c0_20 = arith.constant 0 : index
    %31 = vector.load %arg10[%c0_18, %c0_19, %c0_20] : memref<2x8x128xf32, #tpu.memory_space<vmem>>, vector<1x8x128xf32>
    %32 = vector.shape_cast %31 : vector<1x8x128xf32> to vector<8x128xf32>
    %33 = vector.shape_cast %30 : vector<8x128xf32> to vector<1x8x128xf32>
    tpu.vector_store %arg10[%c0_18, %c0_19, %c0_20], %33 {strides = array<i32>} : memref<2x8x128xf32, #tpu.memory_space<vmem>>, vector<1x8x128xf32>,
    %c1 = arith.constant 1 : index
    %c0_21 = arith.constant 0 : index
    %c0_22 = arith.constant 0 : index
    %c0_23 = arith.constant 0 : index
    %34 = vector.load %arg3[%c1, %c0_21, %c0_22, %c0_23] : memref<2x1x10x128xbf16, #tpu.memory_space<vmem>>, vector<1x1x10x128xbf16>
    %35 = vector.shape_cast %34 : vector<1x1x10x128xbf16> to vector<10x128xbf16>
    %c3_i32_24 = arith.constant 3 : i32
    %36 = arith.muli %arg2, %c3_i32_24 : i32
    %c0_i32_25 = arith.constant 0 : i32
    %37 = arith.addi %36, %c0_i32_25 : i32
    %38 = arith.index_cast %37 : i32 to index
    %c0_26 = arith.constant 0 : index
    %c0_27 = arith.constant 0 : index
    %39 = vector.load %arg4[%38, %c0_26, %c0_27] : memref<9x128x128xbf16, #tpu.memory_space<vmem>>, vector<1x128x128xbf16>
    %40 = vector.shape_cast %39 : vector<1x128x128xbf16> to vector<128x128xbf16>
    %41 = vector.extract_strided_slice %35 {offsets = [0, 0], sizes = [8, 128], strides = [1, 1]} : vector<10x128xbf16> to vector<8x128xbf16>
    %cst_28 = arith.constant dense<0.000000e+00> : vector<8x128xf32>
    %42 = tpu.matmul %41, %40, %cst_28 {dimension_numbers = #tpu.dot_dimension_numbers<[1], [0], [0], [1], [0, 0, 1, 1], [], []>} : vector<8x128xbf16>, vector<128x128xbf16>, vector<8x128xf32> -> vector<8x128xf32>
    %c3_i32_29 = arith.constant 3 : i32
    %43 = arith.muli %arg2, %c3_i32_29 : i32
    %c1_i32_30 = arith.constant 1 : i32
    %44 = arith.addi %43, %c1_i32_30 : i32
    %45 = arith.index_cast %44 : i32 to index
    %c0_31 = arith.constant 0 : index
    %c0_32 = arith.constant 0 : index
    %46 = vector.load %arg4[%45, %c0_31, %c0_32] : memref<9x128x128xbf16, #tpu.memory_space<vmem>>, vector<1x128x128xbf16>
    %47 = vector.shape_cast %46 : vector<1x128x128xbf16> to vector<128x128xbf16>
    %48 = vector.extract_strided_slice %35 {offsets = [1, 0], sizes = [8, 128], strides = [1, 1]} : vector<10x128xbf16> to vector<8x128xbf16>
    %cst_33 = arith.constant dense<0.000000e+00> : vector<8x128xf32>
    %49 = tpu.matmul %48, %47, %cst_33 {dimension_numbers = #tpu.dot_dimension_numbers<[1], [0], [0], [1], [0, 0, 1, 1], [], []>} : vector<8x128xbf16>, vector<128x128xbf16>, vector<8x128xf32> -> vector<8x128xf32>
    %50 = arith.addf %42, %49 : vector<8x128xf32>
    %c3_i32_34 = arith.constant 3 : i32
    %51 = arith.muli %arg2, %c3_i32_34 : i32
    %c2_i32_35 = arith.constant 2 : i32
    %52 = arith.addi %51, %c2_i32_35 : i32
    %53 = arith.index_cast %52 : i32 to index
    %c0_36 = arith.constant 0 : index
    %c0_37 = arith.constant 0 : index
    %54 = vector.load %arg4[%53, %c0_36, %c0_37] : memref<9x128x128xbf16, #tpu.memory_space<vmem>>, vector<1x128x128xbf16>
    %55 = vector.shape_cast %54 : vector<1x128x128xbf16> to vector<128x128xbf16>
    %56 = vector.extract_strided_slice %35 {offsets = [2, 0], sizes = [8, 128], strides = [1, 1]} : vector<10x128xbf16> to vector<8x128xbf16>
    %cst_38 = arith.constant dense<0.000000e+00> : vector<8x128xf32>
    %57 = tpu.matmul %56, %55, %cst_38 {dimension_numbers = #tpu.dot_dimension_numbers<[1], [0], [0], [1], [0, 0, 1, 1], [], []>} : vector<8x128xbf16>, vector<128x128xbf16>, vector<8x128xf32> -> vector<8x128xf32>
    %58 = arith.addf %50, %57 : vector<8x128xf32>
    %c1_39 = arith.constant 1 : index
    %c0_40 = arith.constant 0 : index
    %c0_41 = arith.constant 0 : index
    %59 = vector.load %arg10[%c1_39, %c0_40, %c0_41] : memref<2x8x128xf32, #tpu.memory_space<vmem>>, vector<1x8x128xf32>
    %60 = vector.shape_cast %59 : vector<1x8x128xf32> to vector<8x128xf32>
    %61 = arith.addf %60, %58 : vector<8x128xf32>
    %c1_42 = arith.constant 1 : index
    %c0_43 = arith.constant 0 : index
    %c0_44 = arith.constant 0 : index
    %62 = vector.load %arg10[%c1_42, %c0_43, %c0_44] : memref<2x8x128xf32, #tpu.memory_space<vmem>>, vector<1x8x128xf32>
    %63 = vector.shape_cast %62 : vector<1x8x128xf32> to vector<8x128xf32>
    %64 = vector.shape_cast %61 : vector<8x128xf32> to vector<1x8x128xf32>
    tpu.vector_store %arg10[%c1_42, %c0_43, %c0_44], %64 {strides = array<i32>} : memref<2x8x128xf32, #tpu.memory_space<vmem>>, vector<1x8x128xf32>,
    %c2_i32_45 = arith.constant 2 : i32
    %65 = arith.cmpi eq, %arg2, %c2_i32_45 : i32
    %66 = arith.extui %65 : i1 to i32
    %c0_i32_46 = arith.constant 0 : i32
    %67 = arith.cmpi ne, %66, %c0_i32_46 : i32
    scf.if %67 {
      %c0_47 = arith.constant 0 : index
      %c0_48 = arith.constant 0 : index
      %c0_49 = arith.constant 0 : index
      %68 = vector.load %arg10[%c0_47, %c0_48, %c0_49] : memref<2x8x128xf32, #tpu.memory_space<vmem>>, vector<2x8x128xf32>
      %cst_50 = arith.constant 0.000000e+00 : f32
      %69 = vector.broadcast %cst_50 : f32 to vector<2x8x128xf32>
      %70 = arith.cmpf oge, %68, %69 : vector<2x8x128xf32>
      %c0_51 = arith.constant 0 : index
      %c0_52 = arith.constant 0 : index
      %71 = vector.load %arg5[%c0_51, %c0_52] : memref<1x128xf32, #tpu.memory_space<vmem>>, vector<1x128xf32>
      %72 = vector.shape_cast %71 : vector<1x128xf32> to vector<1x1x128xf32>
      %73 = vector.broadcast %72 : vector<1x1x128xf32> to vector<2x8x128xf32>
      %74 = arith.mulf %73, %68 : vector<2x8x128xf32>
      %75 = arith.select %70, %68, %74 : vector<2x8x128xi1>, vector<2x8x128xf32>
      %c0_53 = arith.constant 0 : index
      %c0_54 = arith.constant 0 : index
      %76 = vector.load %arg6[%c0_53, %c0_54] : memref<1x128xf32, #tpu.memory_space<vmem>>, vector<1x128xf32>
      %77 = vector.shape_cast %76 : vector<1x128xf32> to vector<1x1x128xf32>
      %78 = vector.broadcast %77 : vector<1x1x128xf32> to vector<2x8x128xf32>
      %79 = arith.mulf %75, %78 : vector<2x8x128xf32>
      %c0_55 = arith.constant 0 : index
      %c0_56 = arith.constant 0 : index
      %80 = vector.load %arg7[%c0_55, %c0_56] : memref<1x128xf32, #tpu.memory_space<vmem>>, vector<1x128xf32>
      %81 = vector.shape_cast %80 : vector<1x128xf32> to vector<1x1x128xf32>
      %82 = vector.broadcast %81 : vector<1x1x128xf32> to vector<2x8x128xf32>
      %83 = arith.addf %79, %82 : vector<2x8x128xf32>
      %c0_57 = arith.constant 0 : index
      %c0_58 = arith.constant 0 : index
      %c0_59 = arith.constant 0 : index
      %c0_60 = arith.constant 0 : index
      %84 = vector.load %arg8[%c0_57, %c0_58, %c0_59, %c0_60] : memref<2x1x8x128xf32, #tpu.memory_space<vmem>>, vector<2x1x8x128xf32>
      %85 = vector.shape_cast %84 : vector<2x1x8x128xf32> to vector<2x8x128xf32>
      %86 = arith.addf %83, %85 : vector<2x8x128xf32>
      %c0_61 = arith.constant 0 : index
      %c0_62 = arith.constant 0 : index
      %c0_63 = arith.constant 0 : index
      %c0_64 = arith.constant 0 : index
      %87 = vector.load %arg9[%c0_61, %c0_62, %c0_63, %c0_64] : memref<2x1x8x128xf32, #tpu.memory_space<vmem>>, vector<2x1x8x128xf32>
      %88 = vector.shape_cast %87 : vector<2x1x8x128xf32> to vector<2x8x128xf32>
      %89 = vector.shape_cast %86 : vector<2x8x128xf32> to vector<2x1x8x128xf32>
      tpu.vector_store %arg9[%c0_61, %c0_62, %c0_63, %c0_64], %89 {strides = array<i32>} : memref<2x1x8x128xf32, #tpu.memory_space<vmem>>, vector<2x1x8x128xf32>,
    } else {
    }
    return
  }
  func.func @transform_0(%arg0: i32, %arg1: i32, %arg2: i32) -> (i32, i32, i32, i32) {
    %c1_i32 = arith.constant 1 : i32
    %0 = arith.muli %arg1, %c1_i32 : i32
    %1 = arith.addi %0, %arg2 : i32
    %c0_i32 = arith.constant 0 : i32
    %c0_i32_0 = arith.constant 0 : i32
    %c0_i32_1 = arith.constant 0 : i32
    return %arg0, %1, %c0_i32, %c0_i32_0 : i32, i32, i32, i32
  }
  func.func @transform_1(%arg0: i32, %arg1: i32, %arg2: i32) -> (i32, i32, i32) {
    %c0_i32 = arith.constant 0 : i32
    %c0_i32_0 = arith.constant 0 : i32
    %c0_i32_1 = arith.constant 0 : i32
    %c0_i32_2 = arith.constant 0 : i32
    return %c0_i32, %c0_i32_0, %c0_i32_1 : i32, i32, i32
  }
  func.func @transform_2(%arg0: i32, %arg1: i32, %arg2: i32) -> (i32, i32) {
    %c0_i32 = arith.constant 0 : i32
    %c0_i32_0 = arith.constant 0 : i32
    %c0_i32_1 = arith.constant 0 : i32
    return %c0_i32, %c0_i32_0 : i32, i32
  }
  func.func @transform_3(%arg0: i32, %arg1: i32, %arg2: i32) -> (i32, i32) {
    %c0_i32 = arith.constant 0 : i32
    %c0_i32_0 = arith.constant 0 : i32
    %c0_i32_1 = arith.constant 0 : i32
    return %c0_i32, %c0_i32_0 : i32, i32
  }
  func.func @transform_4(%arg0: i32, %arg1: i32, %arg2: i32) -> (i32, i32) {
    %c0_i32 = arith.constant 0 : i32
    %c0_i32_0 = arith.constant 0 : i32
    %c0_i32_1 = arith.constant 0 : i32
    return %c0_i32, %c0_i32_0 : i32, i32
  }
  func.func @transform_5(%arg0: i32, %arg1: i32, %arg2: i32) -> (i32, i32, i32, i32) {
    %c0_i32 = arith.constant 0 : i32
    %c0_i32_0 = arith.constant 0 : i32
    %c0_i32_1 = arith.constant 0 : i32
    return %arg0, %arg1, %c0_i32, %c0_i32_0 : i32, i32, i32, i32
  }
  func.func @transform_6(%arg0: i32, %arg1: i32, %arg2: i32) -> (i32, i32, i32, i32) {
    %c0_i32 = arith.constant 0 : i32
    %c0_i32_0 = arith.constant 0 : i32
    %c0_i32_1 = arith.constant 0 : i32
    return %arg0, %arg1, %c0_i32, %c0_i32_0 : i32, i32, i32, i32
  }
}

</mosaic_0001>

<llo_original>
// kernel: basic_block_forward.2
$region0: #{basic_block_forward.2}
  #allocation0 [shape = 'u32[]', space=smem, size = 0x4, offset = 0x4, fixed_abs, tag = 'smem constant byte address 0x4 - core index']
  #allocation1 [shape = 'u32[72,128]{1,0:T(1,128)}', space=vmem, size = 0x9000, scoped, tag = 'internal scratch']
  #allocation2 [shape = 'f32[2,8,128]{2,1,0:T(8,128)}', space=vmem, size = 0x2000, scoped, tag = 'scratch operand']
  %s0 = inlined_call_operand.vmem [shape: bf16[2,18,18,4], index: 0, kind: input, shape index: {}]
  %s1 = inlined_call_operand.vmem [shape: bf16[9,4,128], index: 1, kind: input, shape index: {}]
  %s2 = inlined_call_operand.vmem [shape: f32[1,128], index: 2, kind: input, shape index: {}]
  %s3 = inlined_call_operand.vmem [shape: f32[1,128], index: 3, kind: input, shape index: {}]
  %s4 = inlined_call_operand.vmem [shape: f32[1,128], index: 4, kind: input, shape index: {}]
  %s5 = inlined_call_operand.vmem [shape: f32[2,8,8,4], index: 5, kind: input, shape index: {}]
  %s6 = inlined_call_operand.vmem [shape: f32[4,128], index: 6, kind: input, shape index: {}]
  %s7 = inlined_call_operand.vmem [shape: f32[1,128], index: 7, kind: input, shape index: {}]
  %s8 = inlined_call_operand.vmem [shape: f32[2,8,8,128], index: 8, kind: output, shape index: {}]
  %s9 = sld [smem:[#allocation0]]
  $region186: #{basic_block_forward.2} parent=0
    _
  %s11 = ssub.s32 1, %s9
  %s12 = scalar_select 0, %s11, %s9
  $region1: #{basic_block_forward.2} parent=0
    #allocation3 [shape = 'u8[24576]{0}', space=vmem, size = 0x6000, scoped, tag = 'input window, operand 0']
    #allocation4 [shape = 'u8[16384]{0}', space=vmem, size = 0x4000, scoped, tag = 'input window, operand 5']
    #allocation5 [shape = 'u8[16384]{0}', space=vmem, size = 0x4000, scoped, tag = 'output window, operand 0']
    loop: start=0, step=1, limit=26
    $region2: #{basic_block_forward.2} parent=1 // loop_pre_header
      _
    $region3: #{basic_block_forward.2} parent=1 // loop_header
      %s14 = sphi 0, %s18
      %p15 = scmp.ge.s32.totalorder %s14, 26
      %s21 = sphi 0, %s40
      %s22 = sphi 0, %s36
      %s23 = sphi 0, %s32
      %s24 = sphi 0, %s21
      %s25 = sphi 0, %s22
      %s26 = sphi 0, %s23
      %s27 = sphi 0, %s24
      %s28 = sphi 0, %s25
      %s29 = sphi 0, %s26
      %s49 = sphi 0, %s51
      %s52 = sphi 0, %s49
      %s53 = sphi 0, %s52
      %s69 = sphi 0, %s53
      %s73 = sphi 0, %s73
      %s75 = sphi 0, %s73
      %s76 = sphi 0, %s75
      %s90 = sphi 0, %s76
      %s94 = sphi 0, %s94
      %s96 = sphi 0, %s94
      %s97 = sphi 0, %s96
      %s111 = sphi 0, %s97
      %s115 = sphi 0, %s115
      %s117 = sphi 0, %s115
      %s118 = sphi 0, %s117
      %s132 = sphi 0, %s118
      %s136 = sphi 0, %s136
      %s138 = sphi 0, %s136
      %s139 = sphi 0, %s138
      %s153 = sphi 0, %s139
      %s161 = sphi 0, %s163
      %s164 = sphi 0, %s161
      %s165 = sphi 0, %s164
      %s181 = sphi 0, %s165
      %s185 = sphi 0, %s185
      %s187 = sphi 0, %s185
      %s188 = sphi 0, %s187
      %s202 = sphi 0, %s188
      %s206 = sphi 0, %s206
      %s208 = sphi 0, %s206
      %s209 = sphi 0, %s208
      %s223 = sphi 0, %s209
      %s231 = sphi 0, %s233
      %s234 = sphi 0, %s231
      %s235 = sphi 0, %s234
      %s251 = sphi 0, %s235
    $region4: #{basic_block_forward.2} parent=1 // loop_header_branch
      %17 = sbr.rel (%p15) target = $region8
    $region5: #{basic_block_forward.2} parent=1 // loop_body
      %s19 = ssub.s32 %s14, 1
      %s20 = ssub.s32 %s14, 2
      %s30 = sadd.s32 1, %s23
      %p31 = scmp.ge.s32.totalorder %s30, 3
      %s32 = scalar_select %p31, 0, %s30
      %s33 = sadd.s32 1, %s22
      %s34 = scalar_select %p31, %s33, %s22
      %p35 = scmp.ge.s32.totalorder %s34, 8
      %s36 = scalar_select %p35, 0, %s34
      %s37 = sadd.s32 1, %s21
      %s38 = scalar_select %p35, %s37, %s21
      %p39 = scmp.ge.s32.totalorder %s38, 1
      %s40 = scalar_select %p39, 0, %s38
      %s41 = smul.u32 %s22, 2
      %s42 = sadd.s32 %s41, %s23
      %s43 = smul.u32 %s36, 2
      %s44 = sadd.s32 %s43, %s32
      %s45 = ssub.s32 %s21, %s40
      %s46 = ssub.s32 %s42, %s44
      %s47 = sor.u32 %s45, %s46
      %p48 = scmp.eq.s32.totalorder %s47, 0
      %s50 = sadd.s32 %s49, 1
      %s51 = scalar_select %p48, %s49, %s50
      %p54 = pneg %p48
      %p55 = scmp.eq.s32.totalorder %s14, 23
      %p56 = por %p54, %p55
      %p57 = scmp.ne.s32.totalorder %s49, %s52
      %p58 = scmp.eq.s32.totalorder %s14, 0
      %p59 = por %p57, %p58
      %p60 = scmp.ne.s32.totalorder %s49, %s52
      %p61 = scmp.eq.s32.totalorder %s19, 23
      %p62 = por %p60, %p61
      %p63 = scmp.ne.s32.totalorder %s52, %s53
      %p64 = scmp.eq.s32.totalorder %s19, 0
      %p65 = por %p63, %p64
      %p66 = scmp.ne.s32.totalorder %s52, %s53
      %p67 = scmp.eq.s32.totalorder %s20, 23
      %p68 = por %p66, %p67
      %p70 = scmp.ne.s32.totalorder %s53, %s69
      %p71 = scmp.eq.s32.totalorder %s20, 0
      %p72 = por %p70, %p71
      %s74 = sadd.s32 %s73, 1
      %p77 = scmp.eq.s32.totalorder %s14, 23
      %p78 = scmp.ne.s32.totalorder %s73, %s75
      %p79 = scmp.eq.s32.totalorder %s14, 0
      %p80 = por %p78, %p79
      %p81 = scmp.ne.s32.totalorder %s73, %s75
      %p82 = scmp.eq.s32.totalorder %s19, 23
      %p83 = por %p81, %p82
      %p84 = scmp.ne.s32.totalorder %s75, %s76
      %p85 = scmp.eq.s32.totalorder %s19, 0
      %p86 = por %p84, %p85
      %p87 = scmp.ne.s32.totalorder %s75, %s76
      %p88 = scmp.eq.s32.totalorder %s20, 23
      %p89 = por %p87, %p88
      %p91 = scmp.ne.s32.totalorder %s76, %s90
      %p92 = scmp.eq.s32.totalorder %s20, 0
      %p93 = por %p91, %p92
      %s95 = sadd.s32 %s94, 1
      %p98 = scmp.eq.s32.totalorder %s14, 23
      %p99 = scmp.ne.s32.totalorder %s94, %s96
      %p100 = scmp.eq.s32.totalorder %s14, 0
      %p101 = por %p99, %p100
      %p102 = scmp.ne.s32.totalorder %s94, %s96
      %p103 = scmp.eq.s32.totalorder %s19, 23
      %p104 = por %p102, %p103
      %p105 = scmp.ne.s32.totalorder %s96, %s97
      %p106 = scmp.eq.s32.totalorder %s19, 0
      %p107 = por %p105, %p106
      %p108 = scmp.ne.s32.totalorder %s96, %s97
      %p109 = scmp.eq.s32.totalorder %s20, 23
      %p110 = por %p108, %p109
      %p112 = scmp.ne.s32.totalorder %s97, %s111
      %p113 = scmp.eq.s32.totalorder %s20, 0
      %p114 = por %p112, %p113
      %s116 = sadd.s32 %s115, 1
      %p119 = scmp.eq.s32.totalorder %s14, 23
      %p120 = scmp.ne.s32.totalorder %s115, %s117
      %p121 = scmp.eq.s32.totalorder %s14, 0
      %p122 = por %p120, %p121
      %p123 = scmp.ne.s32.totalorder %s115, %s117
      %p124 = scmp.eq.s32.totalorder %s19, 23
      %p125 = por %p123, %p124
      %p126 = scmp.ne.s32.totalorder %s117, %s118
      %p127 = scmp.eq.s32.totalorder %s19, 0
      %p128 = por %p126, %p127
      %p129 = scmp.ne.s32.totalorder %s117, %s118
      %p130 = scmp.eq.s32.totalorder %s20, 23
      %p131 = por %p129, %p130
      %p133 = scmp.ne.s32.totalorder %s118, %s132
      %p134 = scmp.eq.s32.totalorder %s20, 0
      %p135 = por %p133, %p134
      %s137 = sadd.s32 %s136, 1
      %p140 = scmp.eq.s32.totalorder %s14, 23
      %p141 = scmp.ne.s32.totalorder %s136, %s138
      %p142 = scmp.eq.s32.totalorder %s14, 0
      %p143 = por %p141, %p142
      %p144 = scmp.ne.s32.totalorder %s136, %s138
      %p145 = scmp.eq.s32.totalorder %s19, 23
      %p146 = por %p144, %p145
      %p147 = scmp.ne.s32.totalorder %s138, %s139
      %p148 = scmp.eq.s32.totalorder %s19, 0
      %p149 = por %p147, %p148
      %p150 = scmp.ne.s32.totalorder %s138, %s139
      %p151 = scmp.eq.s32.totalorder %s20, 23
      %p152 = por %p150, %p151
      %p154 = scmp.ne.s32.totalorder %s139, %s153
      %p155 = scmp.eq.s32.totalorder %s20, 0
      %p156 = por %p154, %p155
      %s157 = ssub.s32 %s21, %s40
      %s158 = ssub.s32 %s22, %s36
      %s159 = sor.u32 %s157, %s158
      %p160 = scmp.eq.s32.totalorder %s159, 0
      %s162 = sadd.s32 %s161, 1
      %s163 = scalar_select %p160, %s161, %s162
      %p166 = pneg %p160
      %p167 = scmp.eq.s32.totalorder %s14, 23
      %p168 = por %p166, %p167
      %p169 = scmp.ne.s32.totalorder %s161, %s164
      %p170 = scmp.eq.s32.totalorder %s14, 0
      %p171 = por %p169, %p170
      %p172 = scmp.ne.s32.totalorder %s161, %s164
      %p173 = scmp.eq.s32.totalorder %s19, 23
      %p174 = por %p172, %p173
      %p175 = scmp.ne.s32.totalorder %s164, %s165
      %p176 = scmp.eq.s32.totalorder %s19, 0
      %p177 = por %p175, %p176
      %p178 = scmp.ne.s32.totalorder %s164, %s165
      %p179 = scmp.eq.s32.totalorder %s20, 23
      %p180 = por %p178, %p179
      %p182 = scmp.ne.s32.totalorder %s165, %s181
      %p183 = scmp.eq.s32.totalorder %s20, 0
      %p184 = por %p182, %p183
      %s186 = sadd.s32 %s185, 1
      %p189 = scmp.eq.s32.totalorder %s14, 23
      %p190 = scmp.ne.s32.totalorder %s185, %s187
      %p191 = scmp.eq.s32.totalorder %s14, 0
      %p192 = por %p190, %p191
      %p193 = scmp.ne.s32.totalorder %s185, %s187
      %p194 = scmp.eq.s32.totalorder %s19, 23
      %p195 = por %p193, %p194
      %p196 = scmp.ne.s32.totalorder %s187, %s188
      %p197 = scmp.eq.s32.totalorder %s19, 0
      %p198 = por %p196, %p197
      %p199 = scmp.ne.s32.totalorder %s187, %s188
      %p200 = scmp.eq.s32.totalorder %s20, 23
      %p201 = por %p199, %p200
      %p203 = scmp.ne.s32.totalorder %s188, %s202
      %p204 = scmp.eq.s32.totalorder %s20, 0
      %p205 = por %p203, %p204
      %s207 = sadd.s32 %s206, 1
      %p210 = scmp.eq.s32.totalorder %s14, 23
      %p211 = scmp.ne.s32.totalorder %s206, %s208
      %p212 = scmp.eq.s32.totalorder %s14, 0
      %p213 = por %p211, %p212
      %p214 = scmp.ne.s32.totalorder %s206, %s208
      %p215 = scmp.eq.s32.totalorder %s19, 23
      %p216 = por %p214, %p215
      %p217 = scmp.ne.s32.totalorder %s208, %s209
      %p218 = scmp.eq.s32.totalorder %s19, 0
      %p219 = por %p217, %p218
      %p220 = scmp.ne.s32.totalorder %s208, %s209
      %p221 = scmp.eq.s32.totalorder %s20, 23
      %p222 = por %p220, %p221
      %p224 = scmp.ne.s32.totalorder %s209, %s223
      %p225 = scmp.eq.s32.totalorder %s20, 0
      %p226 = por %p224, %p225
      %s227 = ssub.s32 %s21, %s40
      %s228 = ssub.s32 %s22, %s36
      %s229 = sor.u32 %s227, %s228
      %p230 = scmp.eq.s32.totalorder %s229, 0
      %s232 = sadd.s32 %s231, 1
      %s233 = scalar_select %p230, %s231, %s232
      %p236 = pneg %p230
      %p237 = scmp.eq.s32.totalorder %s14, 23
      %p238 = por %p236, %p237
      %p239 = scmp.ne.s32.totalorder %s231, %s234
      %p240 = scmp.eq.s32.totalorder %s14, 0
      %p241 = por %p239, %p240
      %p242 = scmp.ne.s32.totalorder %s231, %s234
      %p243 = scmp.eq.s32.totalorder %s19, 23
      %p244 = por %p242, %p243
      %p245 = scmp.ne.s32.totalorder %s234, %s235
      %p246 = scmp.eq.s32.totalorder %s19, 0
      %p247 = por %p245, %p246
      %p248 = scmp.ne.s32.totalorder %s234, %s235
      %p249 = scmp.eq.s32.totalorder %s20, 23
      %p250 = por %p248, %p249
      %p252 = scmp.ne.s32.totalorder %s235, %s251
      %p253 = scmp.eq.s32.totalorder %s20, 0
      %p254 = por %p252, %p253
      %p255 = scmp.le.s32.totalorder 1, %s14
      %p256 = scmp.lt.s32.totalorder %s14, 25
      %p257 = pnand %p255, %p256
      %p258 = pneg %p257
      // Predicated region
      $region9: #{basic_block_forward.2} parent=5 // pred_check
        _
      $region10: #{basic_block_forward.2} parent=5 // pred_check_branch
        %260 = sbr.rel (%p257) target = $region12
      $region11: #{basic_block_forward.2} parent=5 // pred_region
        %s261 = ssub.s32 %s14, 1
        // Predicated region
        $region13: #{basic_block_forward.2} parent=11 // pred_check
          %p262 = pneg %p86
        $region14: #{basic_block_forward.2} parent=11 // pred_check_branch
          %264 = sbr.rel (%p262) target = $region16
        $region15: #{basic_block_forward.2} parent=11 // pred_region
          _
        $region16: #{basic_block_forward.2} parent=11 // pred_fallthru
          _
        // Predicated region
        $region17: #{basic_block_forward.2} parent=11 // pred_check
          %p265 = pneg %p107
        $region18: #{basic_block_forward.2} parent=11 // pred_check_branch
          %267 = sbr.rel (%p265) target = $region20
        $region19: #{basic_block_forward.2} parent=11 // pred_region
          _
        $region20: #{basic_block_forward.2} parent=11 // pred_fallthru
          _
        // Predicated region
        $region21: #{basic_block_forward.2} parent=11 // pred_check
          %p268 = pneg %p128
        $region22: #{basic_block_forward.2} parent=11 // pred_check_branch
          %270 = sbr.rel (%p268) target = $region24
        $region23: #{basic_block_forward.2} parent=11 // pred_region
          _
        $region24: #{basic_block_forward.2} parent=11 // pred_fallthru
          _
        // Predicated region
        $region25: #{basic_block_forward.2} parent=11 // pred_check
          %p271 = pneg %p149
        $region26: #{basic_block_forward.2} parent=11 // pred_check_branch
          %273 = sbr.rel (%p271) target = $region28
        $region27: #{basic_block_forward.2} parent=11 // pred_region
          _
        $region28: #{basic_block_forward.2} parent=11 // pred_fallthru
          _
        // Predicated region
        $region29: #{basic_block_forward.2} parent=11 // pred_check
          %p274 = pneg %p198
        $region30: #{basic_block_forward.2} parent=11 // pred_check_branch
          %276 = sbr.rel (%p274) target = $region32
        $region31: #{basic_block_forward.2} parent=11 // pred_region
          _
        $region32: #{basic_block_forward.2} parent=11 // pred_fallthru
          _
        // Predicated region
        $region33: #{basic_block_forward.2} parent=11 // pred_check
          %p277 = pneg %p219
        $region34: #{basic_block_forward.2} parent=11 // pred_check_branch
          %279 = sbr.rel (%p277) target = $region36
        $region35: #{basic_block_forward.2} parent=11 // pred_region
          _
        $region36: #{basic_block_forward.2} parent=11 // pred_fallthru
          _
      $region12: #{basic_block_forward.2} parent=5 // pred_fallthru
        _
      %p280 = scmp.lt.s32.totalorder %s14, 24
      // Predicated region
      $region37: #{basic_block_forward.2} parent=5 // pred_check
        %p281 = pneg %p280
      $region38: #{basic_block_forward.2} parent=5 // pred_check_branch
        %283 = sbr.rel (%p281) target = $region40
      $region39: #{basic_block_forward.2} parent=5 // pred_region
        // Predicated region
        $region41: #{basic_block_forward.2} parent=39 // pred_check
          %p284 = pneg %p59
        $region42: #{basic_block_forward.2} parent=39 // pred_check_branch
          %286 = sbr.rel (%p284) target = $region44
        $region43: #{basic_block_forward.2} parent=39 // pred_region
          %s287 = sand.u32 %s49, 1
          %s288 = sand.u32 %s49, 1
          %s289 = smul.addr %s288, 24
          %s290 = scalar_lea.vmem [#allocation3], %s289
          %s291 = smul.u32 %s22, 2
          %s292 = sadd.s32 %s291, %s23
          %s293 = smul.u32 2, %s21
          %s294 = smul.addr %s292, 3
          %s295 = smul.addr %s293, 54
          %s296 = sadd.s32 %s294, %s295
          %s297 = smul.addr %s296, 4
          %s298 = scalar_lea.vmem %s0, %s297
          // Predicated region
          $region45: #{basic_block_forward.2} parent=43 // pred_check
            _
          $region46: #{basic_block_forward.2} parent=43 // pred_check_branch
            %300 = sbr.rel (0) target = $region48
          $region47: #{basic_block_forward.2} parent=43 // pred_region
            // Predicated region
            $region49: #{basic_block_forward.2} parent=47 // pred_check
              _
            $region50: #{basic_block_forward.2} parent=47 // pred_check_branch
              %302 = sbr.rel target = $region52
            $region51: #{basic_block_forward.2} parent=47 // pred_region
              // Predicated region
              $region64: #{basic_block_forward.2} parent=51 // pred_check
                _
              $region65: #{basic_block_forward.2} parent=51 // pred_check_branch
                %328 = sbr.rel (0) target = $region67
              $region66: #{basic_block_forward.2} parent=51 // pred_region
                loop: start=0, step=1, limit=1
                $region68: #{basic_block_forward.2} parent=66 // loop_pre_header
                  _
                $region69: #{basic_block_forward.2} parent=66 // loop_header
                  %s330 = sphi 0, %s334
                  %p331 = scmp.ge.s32.totalorder %s330, 1
                  %s335 = sphi %s298, %s298
                  %s336 = sphi %s290, %s290
                $region70: #{basic_block_forward.2} parent=66 // loop_header_branch
                  %333 = sbr.rel (%p331) target = $region74
                $region71: #{basic_block_forward.2} parent=66 // loop_body
                  _
                $region72: #{basic_block_forward.2} parent=66 // loop_footer
                  %s334 = sadd.s32 1, %s330
                $region73: #{basic_block_forward.2} parent=66 // loop_footer_branch
                  %329 = sbr.rel target = $region69
                $region74: #{basic_block_forward.2} parent=66 // loop_exit
                  _
                %s338 = ssub.s32 16, 1
                loop: start=0, step=1, limit=1
                $region75: #{basic_block_forward.2} parent=66 // loop_pre_header
                  _
                $region76: #{basic_block_forward.2} parent=66 // loop_header
                  %s340 = sphi 0, %s344
                  %p341 = scmp.ge.s32.totalorder %s340, 1
                  %s345 = sphi %s298, %s298
                  %s346 = sphi %s290, %s290
                $region77: #{basic_block_forward.2} parent=66 // loop_header_branch
                  %343 = sbr.rel (%p341) target = $region81
                $region78: #{basic_block_forward.2} parent=66 // loop_body
                  %v347 = vld [vmem:[%s345] sm:%s338]
                  %348 = vst [vmem:[%s346] sm:%s338] %v347
                  %v349 = vld [vmem:[%s345 + $0x4] sm:%s338]
                  %350 = vst [vmem:[%s346 + $0x4] sm:%s338] %v349
                  %v351 = vld [vmem:[%s345 + $0x8] sm:%s338]
                  %352 = vst [vmem:[%s346 + $0x8] sm:%s338] %v351
                  %v353 = vld [vmem:[%s345 + $0xd8] sm:%s338]
                  %354 = vst [vmem:[%s346 + $0xc] sm:%s338] %v353
                  %v355 = vld [vmem:[%s345 + $0xdc] sm:%s338]
                  %356 = vst [vmem:[%s346 + $0x10] sm:%s338] %v355
                  %v357 = vld [vmem:[%s345 + $0xe0] sm:%s338]
                  %358 = vst [vmem:[%s346 + $0x14] sm:%s338] %v357
                $region79: #{basic_block_forward.2} parent=66 // loop_footer
                  %s344 = sadd.s32 1, %s340
                $region80: #{basic_block_forward.2} parent=66 // loop_footer_branch
                  %339 = sbr.rel target = $region76
                $region81: #{basic_block_forward.2} parent=66 // loop_exit
                  _
              $region67: #{basic_block_forward.2} parent=51 // pred_fallthru
                _
            $region52: #{basic_block_forward.2} parent=47 // pred_fallthru
              _
            // Predicated region
            $region53: #{basic_block_forward.2} parent=47 // pred_check
              _
            $region54: #{basic_block_forward.2} parent=47 // pred_check_branch
              %304 = sbr.rel (0) target = $region56
            $region55: #{basic_block_forward.2} parent=47 // pred_region
              %s306 = ssub.s32 16, 1
              loop: start=0, step=1, limit=1
              $region57: #{basic_block_forward.2} parent=55 // loop_pre_header
                _
              $region58: #{basic_block_forward.2} parent=55 // loop_header
                %s308 = sphi 0, %s312
                %p309 = scmp.ge.s32.totalorder %s308, 1
                %s313 = sphi %s298, %s298
                %s314 = sphi %s290, %s290
              $region59: #{basic_block_forward.2} parent=55 // loop_header_branch
                %311 = sbr.rel (%p309) target = $region63
              $region60: #{basic_block_forward.2} parent=55 // loop_body
                %v315 = vld [vmem:[%s313] sm:%s306]
                %316 = vst [vmem:[%s314] sm:%s306] %v315
                %v317 = vld [vmem:[%s313 + $0x4] sm:%s306]
                %318 = vst [vmem:[%s314 + $0x4] sm:%s306] %v317
                %v319 = vld [vmem:[%s313 + $0x8] sm:%s306]
                %320 = vst [vmem:[%s314 + $0x8] sm:%s306] %v319
                %v321 = vld [vmem:[%s313 + $0xd8] sm:%s306]
                %322 = vst [vmem:[%s314 + $0xc] sm:%s306] %v321
                %v323 = vld [vmem:[%s313 + $0xdc] sm:%s306]
                %324 = vst [vmem:[%s314 + $0x10] sm:%s306] %v323
                %v325 = vld [vmem:[%s313 + $0xe0] sm:%s306]
                %326 = vst [vmem:[%s314 + $0x14] sm:%s306] %v325
              $region61: #{basic_block_forward.2} parent=55 // loop_footer
                %s312 = sadd.s32 1, %s308
              $region62: #{basic_block_forward.2} parent=55 // loop_footer_branch
                %307 = sbr.rel target = $region58
              $region63: #{basic_block_forward.2} parent=55 // loop_exit
                _
            $region56: #{basic_block_forward.2} parent=47 // pred_fallthru
              _
          $region48: #{basic_block_forward.2} parent=43 // pred_fallthru
            _
          %359 = vnop
        $region44: #{basic_block_forward.2} parent=39 // pred_fallthru
          _
        // Predicated region
        $region82: #{basic_block_forward.2} parent=39 // pred_check
          %p360 = pneg %p171
        $region83: #{basic_block_forward.2} parent=39 // pred_check_branch
          %362 = sbr.rel (%p360) target = $region85
        $region84: #{basic_block_forward.2} parent=39 // pred_region
          %s363 = sand.u32 %s161, 1
          %s364 = sand.u32 %s161, 1
          %s365 = smul.addr %s364, 16
          %s366 = scalar_lea.vmem [#allocation4], %s365
          %s367 = smul.u32 2, %s21
          %s368 = smul.addr %s367, 8
          %s369 = sadd.s32 %s22, %s368
          %s370 = smul.addr %s369, 8
          %s371 = scalar_lea.vmem %s5, %s370
          // Predicated region
          $region86: #{basic_block_forward.2} parent=84 // pred_check
            _
          $region87: #{basic_block_forward.2} parent=84 // pred_check_branch
            %373 = sbr.rel (0) target = $region89
          $region88: #{basic_block_forward.2} parent=84 // pred_region
            // Predicated region
            $region90: #{basic_block_forward.2} parent=88 // pred_check
              _
            $region91: #{basic_block_forward.2} parent=88 // pred_check_branch
              %375 = sbr.rel (0) target = $region93
            $region92: #{basic_block_forward.2} parent=88 // pred_region
              // Predicated region
              $region105: #{basic_block_forward.2} parent=92 // pred_check
                _
              $region106: #{basic_block_forward.2} parent=92 // pred_check_branch
                %393 = sbr.rel (0) target = $region108
              $region107: #{basic_block_forward.2} parent=92 // pred_region
                loop: start=0, step=1, limit=1
                $region109: #{basic_block_forward.2} parent=107 // loop_pre_header
                  _
                $region110: #{basic_block_forward.2} parent=107 // loop_header
                  %s395 = sphi 0, %s399
                  %p396 = scmp.ge.s32.totalorder %s395, 1
                  %s400 = sphi %s371, %s371
                  %s401 = sphi %s366, %s366
                $region111: #{basic_block_forward.2} parent=107 // loop_header_branch
                  %398 = sbr.rel (%p396) target = $region115
                $region112: #{basic_block_forward.2} parent=107 // loop_body
                  %v402 = vld [vmem:[%s400] sm:$0xff]
                  %403 = vst [vmem:[%s401] sm:$0xff] %v402
                  %v404 = vld [vmem:[%s400 + $0x40] sm:$0xff]
                  %405 = vst [vmem:[%s401 + $0x8] sm:$0xff] %v404
                $region113: #{basic_block_forward.2} parent=107 // loop_footer
                  %s399 = sadd.s32 1, %s395
                $region114: #{basic_block_forward.2} parent=107 // loop_footer_branch
                  %394 = sbr.rel target = $region110
                $region115: #{basic_block_forward.2} parent=107 // loop_exit
                  _
              $region108: #{basic_block_forward.2} parent=92 // pred_fallthru
                _
              // Predicated region
              $region116: #{basic_block_forward.2} parent=92 // pred_check
                _
              $region117: #{basic_block_forward.2} parent=92 // pred_check_branch
                %407 = sbr.rel target = $region119
              $region118: #{basic_block_forward.2} parent=92 // pred_region
                _
              $region119: #{basic_block_forward.2} parent=92 // pred_fallthru
                _
            $region93: #{basic_block_forward.2} parent=88 // pred_fallthru
              _
            // Predicated region
            $region94: #{basic_block_forward.2} parent=88 // pred_check
              _
            $region95: #{basic_block_forward.2} parent=88 // pred_check_branch
              %377 = sbr.rel target = $region97
            $region96: #{basic_block_forward.2} parent=88 // pred_region
              %s379 = ssub.s32 256, 1
              loop: start=0, step=1, limit=1
              $region98: #{basic_block_forward.2} parent=96 // loop_pre_header
                _
              $region99: #{basic_block_forward.2} parent=96 // loop_header
                %s381 = sphi 0, %s385
                %p382 = scmp.ge.s32.totalorder %s381, 1
                %s386 = sphi %s371, %s371
                %s387 = sphi %s366, %s366
              $region100: #{basic_block_forward.2} parent=96 // loop_header_branch
                %384 = sbr.rel (%p382) target = $region104
              $region101: #{basic_block_forward.2} parent=96 // loop_body
                %v388 = vld [vmem:[%s386] sm:%s379]
                %389 = vst [vmem:[%s387] sm:%s379] %v388
                %v390 = vld [vmem:[%s386 + $0x40] sm:%s379]
                %391 = vst [vmem:[%s387 + $0x8] sm:%s379] %v390
              $region102: #{basic_block_forward.2} parent=96 // loop_footer
                %s385 = sadd.s32 1, %s381
              $region103: #{basic_block_forward.2} parent=96 // loop_footer_branch
                %380 = sbr.rel target = $region99
              $region104: #{basic_block_forward.2} parent=96 // loop_exit
                _
            $region97: #{basic_block_forward.2} parent=88 // pred_fallthru
              _
          $region89: #{basic_block_forward.2} parent=84 // pred_fallthru
            _
          %408 = vnop
        $region85: #{basic_block_forward.2} parent=39 // pred_fallthru
          _
      $region40: #{basic_block_forward.2} parent=5 // pred_fallthru
        _
      %p409 = scmp.le.s32.totalorder 1, %s14
      %p410 = scmp.lt.s32.totalorder %s14, 25
      %p411 = pnand %p409, %p410
      %p412 = pneg %p411
      // Predicated region
      $region120: #{basic_block_forward.2} parent=5 // pred_check
        _
      $region121: #{basic_block_forward.2} parent=5 // pred_check_branch
        %414 = sbr.rel (%p411) target = $region123
      $region122: #{basic_block_forward.2} parent=5 // pred_region
        %s415 = ssub.s32 %s14, 1
        %s416 = sand.u32 %s52, 1
        %s417 = sand.u32 %s52, 1
        %s418 = smul.addr %s417, 24
        %s419 = scalar_lea.vmem [#allocation3], %s418
        // Predicated region
        $region124: #{basic_block_forward.2} parent=122 // pred_check
          %p420 = pneg %p65
        $region125: #{basic_block_forward.2} parent=122 // pred_check_branch
          %422 = sbr.rel (%p420) target = $region127
        $region126: #{basic_block_forward.2} parent=122 // pred_region
          _
        $region127: #{basic_block_forward.2} parent=122 // pred_fallthru
          _
        %s423 = sand.u32 %s164, 1
        %s424 = sand.u32 %s164, 1
        %s425 = smul.addr %s424, 16
        %s426 = scalar_lea.vmem [#allocation4], %s425
        // Predicated region
        $region128: #{basic_block_forward.2} parent=122 // pred_check
          %p427 = pneg %p177
        $region129: #{basic_block_forward.2} parent=122 // pred_check_branch
          %429 = sbr.rel (%p427) target = $region131
        $region130: #{basic_block_forward.2} parent=122 // pred_region
          _
        $region131: #{basic_block_forward.2} parent=122 // pred_fallthru
          _
        %s430 = sand.u32 %s52, 1
        %s431 = sand.u32 %s52, 1
        %s432 = smul.addr %s431, 24
        %s433 = scalar_lea.vmem [#allocation3], %s432
        %p434 = pneg %p65
        %p435 = pneg %p62
        %p436 = pneg %p86
        %p437 = pneg %p83
        %p438 = pneg %p107
        %p439 = pneg %p104
        %p440 = pneg %p128
        %p441 = pneg %p125
        %p442 = pneg %p149
        %p443 = pneg %p146
        %s444 = sand.u32 %s164, 1
        %s445 = sand.u32 %s164, 1
        %s446 = smul.addr %s445, 16
        %s447 = scalar_lea.vmem [#allocation4], %s446
        %p448 = pneg %p177
        %p449 = pneg %p174
        %p450 = pneg %p198
        %p451 = pneg %p195
        %p452 = pneg %p219
        %p453 = pneg %p216
        %p454 = pneg %p247
        %p455 = pneg %p244
        %s456 = sand.u32 %s234, 1
        %s457 = sand.u32 %s234, 1
        %s458 = smul.addr %s457, 16
        %s459 = scalar_lea.vmem [#allocation5], %s458
        %s460 = smul.u32 %s25, 2
        %s461 = sadd.s32 %s460, %s26
        %s462 = smul.u32 2, %s24
        %s463 = smul.u32 2, %s24
        %s464 = smul.u32 2, %s24
        %p466 = scmp.eq.s32.totalorder %s26, 0
        // Predicated region
        $region132: #{basic_block_forward.2} parent=122 // pred_check
          %p467 = pneg %p466
        $region133: #{basic_block_forward.2} parent=122 // pred_check_branch
          %469 = sbr.rel (%p467) target = $region135
        $region134: #{basic_block_forward.2} parent=122 // pred_region
          %470 = vst [vmem:[#allocation2] sm:$0xff] 0.0
          %471 = vst [vmem:[#allocation2 + $0x8] sm:$0xff] 0.0
        $region135: #{basic_block_forward.2} parent=122 // pred_fallthru
          _
        %v472 = vld [vmem:[%s419] sm:$0xf]
        %v473 = vld [vmem:[%s419 + $0x4] sm:$0xf]
        %v474 = vld [vmem:[%s419 + $0x8] sm:$0x1]
        %s475 = smul.u32 %s26, 3
        %s476 = smul.addr %s475, 2
        %s477 = scalar_lea.vmem %s1, %s476
        %v478 = vld [vmem:[%s477] sm:$0x3]
        %s479 = sadd.s32 %s475, 1
        %s480 = smul.addr %s479, 2
        %s481 = scalar_lea.vmem %s1, %s480
        %v482 = vld [vmem:[%s481] sm:$0x3]
        %v485 = vunpack.c.l.b16 %v473
        %v486 = vunpack.c.l.b16 %v474
        %v487 = vpack.c.b16 %v486, %v485
        %v489 = vshrl.u32 %v487, 16
        %v491 = vshll.u32 %v487, 16
        %v493 = vrot.slane %v491, 1
        %v494 = vor.u32 %v489, %v493
        %vm495 = vcmask 31744
        %v497 = vsel %vm495, %v494, 0
        %vm499 = vcmask 1041408
        %v501 = vsel %vm499, %v482, 0
        %503 = vmatpush.bf16.msra.mxu0 0
        %504 = vmatpush.bf16.msra.mxu0 0
        %505 = vmatpush.bf16.msra.mxu0 0
        %506 = vmatpush.bf16.msra.mxu0 0
        %507 = vmatpush.bf16.msra.mxu0 0
        %508 = vmatpush.bf16.msra.mxu0 0
        %509 = vmatpush.bf16.msra.mxu0 0
        %510 = vmatpush.bf16.msra.mxu0 %v501
        %511 = vmatmul.bf16.gmra.mxu0 %v497
        %v512 = vpop.f32.mrf.mxu0
        %v513 = vadd.f32 0.0, %v512
        %v514 = vpop.f32.mrf.mxu0
        %515 = vdwg.mxu0
        %v517 = vsel %vm495, %v472, 0
        %v520 = vsel %vm499, %v478, 0
        %522 = vmatpush.bf16.msra.mxu0 0
        %523 = vmatpush.bf16.msra.mxu0 0
        %524 = vmatpush.bf16.msra.mxu0 0
        %525 = vmatpush.bf16.msra.mxu0 0
        %526 = vmatpush.bf16.msra.mxu0 0
        %527 = vmatpush.bf16.msra.mxu0 0
        %528 = vmatpush.bf16.msra.mxu0 0
        %529 = vmatpush.bf16.msra.mxu0 %v520
        %530 = vmatmul.bf16.gmra.mxu0 %v517
        %v531 = vpop.f32.mrf.mxu0
        %v532 = vadd.f32 %v513, %v531
        %v533 = vpop.f32.mrf.mxu0
        %534 = vdwg.mxu0
        %s535 = sadd.s32 %s475, 2
        %s536 = smul.addr %s535, 2
        %s537 = scalar_lea.vmem %s1, %s536
        %v538 = vld [vmem:[%s537] sm:$0x3]
        %v540 = vunpack.c.l.b16 %v472
        %v541 = vpack.c.b16 %v485, %v540
        %v543 = vshrl.u32 %v541, 16
        %v545 = vshll.u32 %v541, 16
        %v547 = vrot.slane %v545, 1
        %v548 = vor.u32 %v543, %v547
        %v550 = vsel %vm495, %v548, 0
        %v553 = vsel %vm499, %v538, 0
        %555 = vmatpush.bf16.msra.mxu0 0
        %556 = vmatpush.bf16.msra.mxu0 0
        %557 = vmatpush.bf16.msra.mxu0 0
        %558 = vmatpush.bf16.msra.mxu0 0
        %559 = vmatpush.bf16.msra.mxu0 0
        %560 = vmatpush.bf16.msra.mxu0 0
        %561 = vmatpush.bf16.msra.mxu0 0
        %562 = vmatpush.bf16.msra.mxu0 %v553
        %563 = vmatmul.bf16.gmra.mxu0 %v550
        %v564 = vpop.f32.mrf.mxu0
        %v565 = vadd.f32 0.0, %v564
        %v566 = vpop.f32.mrf.mxu0
        %567 = vdwg.mxu0
        %v568 = vadd.f32 %v532, %v565
        %v569 = vld [vmem:[#allocation2] sm:$0xff]
        %v570 = vadd.f32 %v569, %v568
        %571 = vst [vmem:[#allocation2] sm:$0xff] %v570
        %s572 = scalar_lea.vmem %s419, 12 [#allocation3]
        %v573 = vld [vmem:[%s572] sm:$0xf]
        %v574 = vld [vmem:[%s572 + $0x4] sm:$0xf]
        %v575 = vld [vmem:[%s572 + $0x8] sm:$0x1]
        %v576 = vld [vmem:[%s477] sm:$0x3]
        %v577 = vld [vmem:[%s481] sm:$0x3]
        %v580 = vunpack.c.l.b16 %v574
        %v581 = vunpack.c.l.b16 %v575
        %v582 = vpack.c.b16 %v581, %v580
        %v584 = vshrl.u32 %v582, 16
        %v586 = vshll.u32 %v582, 16
        %v588 = vrot.slane %v586, 1
        %v589 = vor.u32 %v584, %v588
        %v591 = vsel %vm495, %v589, 0
        %v594 = vsel %vm499, %v577, 0
        %596 = vmatpush.bf16.msra.mxu0 0
        %597 = vmatpush.bf16.msra.mxu0 0
        %598 = vmatpush.bf16.msra.mxu0 0
        %599 = vmatpush.bf16.msra.mxu0 0
        %600 = vmatpush.bf16.msra.mxu0 0
        %601 = vmatpush.bf16.msra.mxu0 0
        %602 = vmatpush.bf16.msra.mxu0 0
        %603 = vmatpush.bf16.msra.mxu0 %v594
        %604 = vmatmul.bf16.gmra.mxu0 %v591
        %v605 = vpop.f32.mrf.mxu0
        %v606 = vadd.f32 0.0, %v605
        %v607 = vpop.f32.mrf.mxu0
        %608 = vdwg.mxu0
        %v610 = vsel %vm495, %v573, 0
        %v613 = vsel %vm499, %v576, 0
        %615 = vmatpush.bf16.msra.mxu0 0
        %616 = vmatpush.bf16.msra.mxu0 0
        %617 = vmatpush.bf16.msra.mxu0 0
        %618 = vmatpush.bf16.msra.mxu0 0
        %619 = vmatpush.bf16.msra.mxu0 0
        %620 = vmatpush.bf16.msra.mxu0 0
        %621 = vmatpush.bf16.msra.mxu0 0
        %622 = vmatpush.bf16.msra.mxu0 %v613
        %623 = vmatmul.bf16.gmra.mxu0 %v610
        %v624 = vpop.f32.mrf.mxu0
        %v625 = vadd.f32 %v606, %v624
        %v626 = vpop.f32.mrf.mxu0
        %627 = vdwg.mxu0
        %v628 = vld [vmem:[%s537] sm:$0x3]
        %v630 = vunpack.c.l.b16 %v573
        %v631 = vpack.c.b16 %v580, %v630
        %v633 = vshrl.u32 %v631, 16
        %v635 = vshll.u32 %v631, 16
        %v637 = vrot.slane %v635, 1
        %v638 = vor.u32 %v633, %v637
        %v640 = vsel %vm495, %v638, 0
        %v643 = vsel %vm499, %v628, 0
        %645 = vmatpush.bf16.msra.mxu0 0
        %646 = vmatpush.bf16.msra.mxu0 0
        %647 = vmatpush.bf16.msra.mxu0 0
        %648 = vmatpush.bf16.msra.mxu0 0
        %649 = vmatpush.bf16.msra.mxu0 0
        %650 = vmatpush.bf16.msra.mxu0 0
        %651 = vmatpush.bf16.msra.mxu0 0
        %652 = vmatpush.bf16.msra.mxu0 %v643
        %653 = vmatmul.bf16.gmra.mxu0 %v640
        %v654 = vpop.f32.mrf.mxu0
        %v655 = vadd.f32 0.0, %v654
        %v656 = vpop.f32.mrf.mxu0
        %657 = vdwg.mxu0
        %v658 = vadd.f32 %v625, %v655
        %s659 = scalar_lea.vmem [#allocation2], 8
        %v660 = vld [vmem:[%s659] sm:$0xff]
        %v661 = vadd.f32 %v660, %v658
        %662 = vst [vmem:[%s659] sm:$0xff] %v661
        %p663 = scmp.eq.s32.totalorder %s26, 2
        // Predicated region
        $region136: #{basic_block_forward.2} parent=122 // pred_check
          %p664 = pneg %p663
        $region137: #{basic_block_forward.2} parent=122 // pred_check_branch
          %666 = sbr.rel (%p664) target = $region139
        $region138: #{basic_block_forward.2} parent=122 // pred_region
          %v667 = vld [vmem:[#allocation2] sm:$0xff]
          %v668 = vld [vmem:[#allocation2 + $0x8] sm:$0xff]
          %vm669 = vcmp.ge.f32.partialorder %v667, 0.0
          %vm670 = vcmp.ge.f32.partialorder %v668, 0.0
          %v671 = vld [vmem:[%s2] sm:$0x1]
          %v673 = vperm.slane %v671, 0
          %v675 = vmul.f32 %v673, %v667
          %v676 = vmul.f32 %v673, %v668
          %v677 = vsel %vm669, %v667, %v675
          %v678 = vsel %vm670, %v668, %v676
          %v679 = vld [vmem:[%s3] sm:$0x1]
          %v681 = vperm.slane %v679, 0
          %v683 = vmul.f32 %v677, %v681
          %v684 = vmul.f32 %v678, %v681
          %v685 = vld [vmem:[%s4] sm:$0x1]
          %v687 = vperm.slane %v685, 0
          %v689 = vadd.f32 %v683, %v687
          %v690 = vadd.f32 %v684, %v687
          %v691 = vld [vmem:[%s426] sm:$0xff]
          %v692 = vld [vmem:[%s6] sm:$0xf]
          %v694 = vsel %vm495, %v691, 0
          %vm696 = vcmask 1043456
          %v698 = vsel %vm696, %v692, 0
          %700 = vmatpush.msra.mxu0 0.0
          %701 = vmatpush.msra.mxu0 0.0
          %702 = vmatpush.msra.mxu0 0.0
          %703 = vmatpush.msra.mxu0 0.0
          %704 = vmatpush.msra.mxu0 0.0
          %705 = vmatpush.msra.mxu0 0.0
          %706 = vmatpush.msra.mxu0 0.0
          %707 = vmatpush.msra.mxu0 0.0
          %708 = vmatpush.msra.mxu0 0.0
          %709 = vmatpush.msra.mxu0 0.0
          %710 = vmatpush.msra.mxu0 0.0
          %711 = vmatpush.msra.mxu0 0.0
          %712 = vmatpush.msra.mxu0 0.0
          %713 = vmatpush.msra.mxu0 0.0
          %714 = vmatpush.msra.mxu0 0.0
          %715 = vmatpush.msra.mxu0 %v698
          %716 = vmatmul.f32.gmra.mxu0 %v694
          %v717 = vpop.f32.mrf.mxu0
          %v718 = vadd.f32 0.0, %v717
          %719 = vdwg.mxu0
          %v720 = vadd.f32 %v689, %v718
          %v721 = vld [vmem:[%s7] sm:$0x1]
          %v723 = vperm.slane %v721, 0
          %v725 = vadd.f32 %v720, %v723
          %726 = vst [vmem:[%s459] sm:$0xff] %v725
          %s727 = scalar_lea.vmem %s426, 8 [#allocation4]
          %v728 = vld [vmem:[%s727] sm:$0xff]
          %v729 = vld [vmem:[%s6] sm:$0xf]
          %v731 = vsel %vm495, %v728, 0
          %v734 = vsel %vm696, %v729, 0
          %736 = vmatpush.msra.mxu0 0.0
          %737 = vmatpush.msra.mxu0 0.0
          %738 = vmatpush.msra.mxu0 0.0
          %739 = vmatpush.msra.mxu0 0.0
          %740 = vmatpush.msra.mxu0 0.0
          %741 = vmatpush.msra.mxu0 0.0
          %742 = vmatpush.msra.mxu0 0.0
          %743 = vmatpush.msra.mxu0 0.0
          %744 = vmatpush.msra.mxu0 0.0
          %745 = vmatpush.msra.mxu0 0.0
          %746 = vmatpush.msra.mxu0 0.0
          %747 = vmatpush.msra.mxu0 0.0
          %748 = vmatpush.msra.mxu0 0.0
          %749 = vmatpush.msra.mxu0 0.0
          %750 = vmatpush.msra.mxu0 0.0
          %751 = vmatpush.msra.mxu0 %v734
          %752 = vmatmul.f32.gmra.mxu0 %v731
          %v753 = vpop.f32.mrf.mxu0
          %v754 = vadd.f32 0.0, %v753
          %755 = vdwg.mxu0
          %v756 = vadd.f32 %v690, %v754
          %v757 = vld [vmem:[%s7] sm:$0x1]
          %v759 = vperm.slane %v757, 0
          %v761 = vadd.f32 %v756, %v759
          %s762 = scalar_lea.vmem %s459, 8 [#allocation5]
          %763 = vst [vmem:[%s762] sm:$0xff] %v761
        $region139: #{basic_block_forward.2} parent=122 // pred_fallthru
          _
        %s764 = sand.u32 %s234, 1
        %s765 = sand.u32 %s234, 1
        %s766 = smul.addr %s765, 16
        %s767 = scalar_lea.vmem [#allocation5], %s766
        // Predicated region
        $region140: #{basic_block_forward.2} parent=122 // pred_check
          %p768 = pneg %p244
        $region141: #{basic_block_forward.2} parent=122 // pred_check_branch
          %770 = sbr.rel (%p768) target = $region143
        $region142: #{basic_block_forward.2} parent=122 // pred_region
          %s771 = smul.u32 2, %s24
          %s772 = smul.addr %s771, 8
          %s773 = sadd.s32 %s25, %s772
          %s774 = smul.addr %s773, 8
          %s775 = scalar_lea.vmem %s8, %s774
          // Predicated region
          $region144: #{basic_block_forward.2} parent=142 // pred_check
            _
          $region145: #{basic_block_forward.2} parent=142 // pred_check_branch
            %777 = sbr.rel (0) target = $region147
          $region146: #{basic_block_forward.2} parent=142 // pred_region
            // Predicated region
            $region148: #{basic_block_forward.2} parent=146 // pred_check
              _
            $region149: #{basic_block_forward.2} parent=146 // pred_check_branch
              %779 = sbr.rel (0) target = $region151
            $region150: #{basic_block_forward.2} parent=146 // pred_region
              // Predicated region
              $region163: #{basic_block_forward.2} parent=150 // pred_check
                _
              $region164: #{basic_block_forward.2} parent=150 // pred_check_branch
                %797 = sbr.rel (0) target = $region166
              $region165: #{basic_block_forward.2} parent=150 // pred_region
                loop: start=0, step=1, limit=1
                $region167: #{basic_block_forward.2} parent=165 // loop_pre_header
                  _
                $region168: #{basic_block_forward.2} parent=165 // loop_header
                  %s799 = sphi 0, %s803
                  %p800 = scmp.ge.s32.totalorder %s799, 1
                  %s804 = sphi %s767, %s767
                  %s805 = sphi %s775, %s775
                $region169: #{basic_block_forward.2} parent=165 // loop_header_branch
                  %802 = sbr.rel (%p800) target = $region173
                $region170: #{basic_block_forward.2} parent=165 // loop_body
                  %v806 = vld [vmem:[%s804] sm:$0xff]
                  %807 = vst [vmem:[%s805] sm:$0xff] %v806
                  %v808 = vld [vmem:[%s804 + $0x8] sm:$0xff]
                  %809 = vst [vmem:[%s805 + $0x40] sm:$0xff] %v808
                $region171: #{basic_block_forward.2} parent=165 // loop_footer
                  %s803 = sadd.s32 1, %s799
                $region172: #{basic_block_forward.2} parent=165 // loop_footer_branch
                  %798 = sbr.rel target = $region168
                $region173: #{basic_block_forward.2} parent=165 // loop_exit
                  _
              $region166: #{basic_block_forward.2} parent=150 // pred_fallthru
                _
              // Predicated region
              $region174: #{basic_block_forward.2} parent=150 // pred_check
                _
              $region175: #{basic_block_forward.2} parent=150 // pred_check_branch
                %811 = sbr.rel target = $region177
              $region176: #{basic_block_forward.2} parent=150 // pred_region
                _
              $region177: #{basic_block_forward.2} parent=150 // pred_fallthru
                _
            $region151: #{basic_block_forward.2} parent=146 // pred_fallthru
              _
            // Predicated region
            $region152: #{basic_block_forward.2} parent=146 // pred_check
              _
            $region153: #{basic_block_forward.2} parent=146 // pred_check_branch
              %781 = sbr.rel target = $region155
            $region154: #{basic_block_forward.2} parent=146 // pred_region
              %s783 = ssub.s32 256, 1
              loop: start=0, step=1, limit=1
              $region156: #{basic_block_forward.2} parent=154 // loop_pre_header
                _
              $region157: #{basic_block_forward.2} parent=154 // loop_header
                %s785 = sphi 0, %s789
                %p786 = scmp.ge.s32.totalorder %s785, 1
                %s790 = sphi %s767, %s767
                %s791 = sphi %s775, %s775
              $region158: #{basic_block_forward.2} parent=154 // loop_header_branch
                %788 = sbr.rel (%p786) target = $region162
              $region159: #{basic_block_forward.2} parent=154 // loop_body
                %v792 = vld [vmem:[%s790] sm:%s783]
                %793 = vst [vmem:[%s791] sm:%s783] %v792
                %v794 = vld [vmem:[%s790 + $0x8] sm:%s783]
                %795 = vst [vmem:[%s791 + $0x40] sm:%s783] %v794
              $region160: #{basic_block_forward.2} parent=154 // loop_footer
                %s789 = sadd.s32 1, %s785
              $region161: #{basic_block_forward.2} parent=154 // loop_footer_branch
                %784 = sbr.rel target = $region157
              $region162: #{basic_block_forward.2} parent=154 // loop_exit
                _
            $region155: #{basic_block_forward.2} parent=146 // pred_fallthru
              _
          $region147: #{basic_block_forward.2} parent=142 // pred_fallthru
            _
          %812 = vnop
        $region143: #{basic_block_forward.2} parent=122 // pred_fallthru
          _
      $region123: #{basic_block_forward.2} parent=5 // pred_fallthru
        _
      %p813 = scmp.le.s32.totalorder 2, %s14
      // Predicated region
      $region178: #{basic_block_forward.2} parent=5 // pred_check
        %p814 = pneg %p813
      $region179: #{basic_block_forward.2} parent=5 // pred_check_branch
        %816 = sbr.rel (%p814) target = $region181
      $region180: #{basic_block_forward.2} parent=5 // pred_region
        %s817 = ssub.s32 %s14, 2
        // Predicated region
        $region182: #{basic_block_forward.2} parent=180 // pred_check
          %p818 = pneg %p250
        $region183: #{basic_block_forward.2} parent=180 // pred_check_branch
          %820 = sbr.rel (%p818) target = $region185
        $region184: #{basic_block_forward.2} parent=180 // pred_region
          %s821 = sand.u32 %s235, 1
          %s822 = sand.u32 %s235, 1
          %s823 = smul.addr %s822, 16
          %s824 = scalar_lea.vmem [#allocation5], %s823
        $region185: #{basic_block_forward.2} parent=180 // pred_fallthru
          _
      $region181: #{basic_block_forward.2} parent=5 // pred_fallthru
        _
    $region6: #{basic_block_forward.2} parent=1 // loop_footer
      %s18 = sadd.s32 1, %s14
    $region7: #{basic_block_forward.2} parent=1 // loop_footer_branch
      %13 = sbr.rel target = $region3
    $region8: #{basic_block_forward.2} parent=1 // loop_exit
      _

// kernel: basic_block_forward.3
$region0: #{basic_block_forward.3}
  #allocation0 [shape = 'u32[]', space=smem, size = 0x4, offset = 0x4, fixed_abs, tag = 'smem constant byte address 0x4 - core index']
  #allocation1 [shape = 'u32[72,128]{1,0:T(1,128)}', space=vmem, size = 0x9000, scoped, tag = 'internal scratch']
  #allocation2 [shape = 'f32[2,8,128]{2,1,0:T(8,128)}', space=vmem, size = 0x2000, scoped, tag = 'scratch operand']
  %s0 = inlined_call_operand.vmem [shape: bf16[2,10,10,128], index: 0, kind: input, shape index: {}]
  %s1 = inlined_call_operand.vmem [shape: bf16[9,128,128], index: 1, kind: input, shape index: {}]
  %s2 = inlined_call_operand.vmem [shape: f32[1,128], index: 2, kind: input, shape index: {}]
  %s3 = inlined_call_operand.vmem [shape: f32[1,128], index: 3, kind: input, shape index: {}]
  %s4 = inlined_call_operand.vmem [shape: f32[1,128], index: 4, kind: input, shape index: {}]
  %s5 = inlined_call_operand.vmem [shape: f32[2,8,8,128], index: 5, kind: input, shape index: {}]
  %s6 = inlined_call_operand.vmem [shape: f32[2,8,8,128], index: 6, kind: output, shape index: {}]
  %s7 = sld [smem:[#allocation0]]
  $region178: #{basic_block_forward.3} parent=0
    _
  %s9 = ssub.s32 1, %s7
  %s10 = scalar_select 0, %s9, %s7
  $region1: #{basic_block_forward.3} parent=0
    #allocation3 [shape = 'u8[16384]{0}', space=vmem, size = 0x4000, scoped, tag = 'input window, operand 0']
    #allocation4 [shape = 'u8[16384]{0}', space=vmem, size = 0x4000, scoped, tag = 'input window, operand 5']
    #allocation5 [shape = 'u8[16384]{0}', space=vmem, size = 0x4000, scoped, tag = 'output window, operand 0']
    loop: start=0, step=1, limit=26
    $region2: #{basic_block_forward.3} parent=1 // loop_pre_header
      _
    $region3: #{basic_block_forward.3} parent=1 // loop_header
      %s12 = sphi 0, %s16
      %p13 = scmp.ge.s32.totalorder %s12, 26
      %s19 = sphi 0, %s38
      %s20 = sphi 0, %s34
      %s21 = sphi 0, %s30
      %s22 = sphi 0, %s19
      %s23 = sphi 0, %s20
      %s24 = sphi 0, %s21
      %s25 = sphi 0, %s22
      %s26 = sphi 0, %s23
      %s27 = sphi 0, %s24
      %s45 = sphi 0, %s47
      %s48 = sphi 0, %s45
      %s49 = sphi 0, %s48
      %s65 = sphi 0, %s49
      %s69 = sphi 0, %s69
      %s71 = sphi 0, %s69
      %s72 = sphi 0, %s71
      %s86 = sphi 0, %s72
      %s90 = sphi 0, %s90
      %s92 = sphi 0, %s90
      %s93 = sphi 0, %s92
      %s107 = sphi 0, %s93
      %s111 = sphi 0, %s111
      %s113 = sphi 0, %s111
      %s114 = sphi 0, %s113
      %s128 = sphi 0, %s114
      %s132 = sphi 0, %s132
      %s134 = sphi 0, %s132
      %s135 = sphi 0, %s134
      %s149 = sphi 0, %s135
      %s157 = sphi 0, %s159
      %s160 = sphi 0, %s157
      %s161 = sphi 0, %s160
      %s177 = sphi 0, %s161
      %s185 = sphi 0, %s187
      %s188 = sphi 0, %s185
      %s189 = sphi 0, %s188
      %s205 = sphi 0, %s189
    $region4: #{basic_block_forward.3} parent=1 // loop_header_branch
      %15 = sbr.rel (%p13) target = $region8
    $region5: #{basic_block_forward.3} parent=1 // loop_body
      %s17 = ssub.s32 %s12, 1
      %s18 = ssub.s32 %s12, 2
      %s28 = sadd.s32 1, %s21
      %p29 = scmp.ge.s32.totalorder %s28, 3
      %s30 = scalar_select %p29, 0, %s28
      %s31 = sadd.s32 1, %s20
      %s32 = scalar_select %p29, %s31, %s20
      %p33 = scmp.ge.s32.totalorder %s32, 8
      %s34 = scalar_select %p33, 0, %s32
      %s35 = sadd.s32 1, %s19
      %s36 = scalar_select %p33, %s35, %s19
      %p37 = scmp.ge.s32.totalorder %s36, 1
      %s38 = scalar_select %p37, 0, %s36
      %s39 = sadd.s32 %s20, %s21
      %s40 = sadd.s32 %s34, %s30
      %s41 = ssub.s32 %s19, %s38
      %s42 = ssub.s32 %s39, %s40
      %s43 = sor.u32 %s41, %s42
      %p44 = scmp.eq.s32.totalorder %s43, 0
      %s46 = sadd.s32 %s45, 1
      %s47 = scalar_select %p44, %s45, %s46
      %p50 = pneg %p44
      %p51 = scmp.eq.s32.totalorder %s12, 23
      %p52 = por %p50, %p51
      %p53 = scmp.ne.s32.totalorder %s45, %s48
      %p54 = scmp.eq.s32.totalorder %s12, 0
      %p55 = por %p53, %p54
      %p56 = scmp.ne.s32.totalorder %s45, %s48
      %p57 = scmp.eq.s32.totalorder %s17, 23
      %p58 = por %p56, %p57
      %p59 = scmp.ne.s32.totalorder %s48, %s49
      %p60 = scmp.eq.s32.totalorder %s17, 0
      %p61 = por %p59, %p60
      %p62 = scmp.ne.s32.totalorder %s48, %s49
      %p63 = scmp.eq.s32.totalorder %s18, 23
      %p64 = por %p62, %p63
      %p66 = scmp.ne.s32.totalorder %s49, %s65
      %p67 = scmp.eq.s32.totalorder %s18, 0
      %p68 = por %p66, %p67
      %s70 = sadd.s32 %s69, 1
      %p73 = scmp.eq.s32.totalorder %s12, 23
      %p74 = scmp.ne.s32.totalorder %s69, %s71
      %p75 = scmp.eq.s32.totalorder %s12, 0
      %p76 = por %p74, %p75
      %p77 = scmp.ne.s32.totalorder %s69, %s71
      %p78 = scmp.eq.s32.totalorder %s17, 23
      %p79 = por %p77, %p78
      %p80 = scmp.ne.s32.totalorder %s71, %s72
      %p81 = scmp.eq.s32.totalorder %s17, 0
      %p82 = por %p80, %p81
      %p83 = scmp.ne.s32.totalorder %s71, %s72
      %p84 = scmp.eq.s32.totalorder %s18, 23
      %p85 = por %p83, %p84
      %p87 = scmp.ne.s32.totalorder %s72, %s86
      %p88 = scmp.eq.s32.totalorder %s18, 0
      %p89 = por %p87, %p88
      %s91 = sadd.s32 %s90, 1
      %p94 = scmp.eq.s32.totalorder %s12, 23
      %p95 = scmp.ne.s32.totalorder %s90, %s92
      %p96 = scmp.eq.s32.totalorder %s12, 0
      %p97 = por %p95, %p96
      %p98 = scmp.ne.s32.totalorder %s90, %s92
      %p99 = scmp.eq.s32.totalorder %s17, 23
      %p100 = por %p98, %p99
      %p101 = scmp.ne.s32.totalorder %s92, %s93
      %p102 = scmp.eq.s32.totalorder %s17, 0
      %p103 = por %p101, %p102
      %p104 = scmp.ne.s32.totalorder %s92, %s93
      %p105 = scmp.eq.s32.totalorder %s18, 23
      %p106 = por %p104, %p105
      %p108 = scmp.ne.s32.totalorder %s93, %s107
      %p109 = scmp.eq.s32.totalorder %s18, 0
      %p110 = por %p108, %p109
      %s112 = sadd.s32 %s111, 1
      %p115 = scmp.eq.s32.totalorder %s12, 23
      %p116 = scmp.ne.s32.totalorder %s111, %s113
      %p117 = scmp.eq.s32.totalorder %s12, 0
      %p118 = por %p116, %p117
      %p119 = scmp.ne.s32.totalorder %s111, %s113
      %p120 = scmp.eq.s32.totalorder %s17, 23
      %p121 = por %p119, %p120
      %p122 = scmp.ne.s32.totalorder %s113, %s114
      %p123 = scmp.eq.s32.totalorder %s17, 0
      %p124 = por %p122, %p123
      %p125 = scmp.ne.s32.totalorder %s113, %s114
      %p126 = scmp.eq.s32.totalorder %s18, 23
      %p127 = por %p125, %p126
      %p129 = scmp.ne.s32.totalorder %s114, %s128
      %p130 = scmp.eq.s32.totalorder %s18, 0
      %p131 = por %p129, %p130
      %s133 = sadd.s32 %s132, 1
      %p136 = scmp.eq.s32.totalorder %s12, 23
      %p137 = scmp.ne.s32.totalorder %s132, %s134
      %p138 = scmp.eq.s32.totalorder %s12, 0
      %p139 = por %p137, %p138
      %p140 = scmp.ne.s32.totalorder %s132, %s134
      %p141 = scmp.eq.s32.totalorder %s17, 23
      %p142 = por %p140, %p141
      %p143 = scmp.ne.s32.totalorder %s134, %s135
      %p144 = scmp.eq.s32.totalorder %s17, 0
      %p145 = por %p143, %p144
      %p146 = scmp.ne.s32.totalorder %s134, %s135
      %p147 = scmp.eq.s32.totalorder %s18, 23
      %p148 = por %p146, %p147
      %p150 = scmp.ne.s32.totalorder %s135, %s149
      %p151 = scmp.eq.s32.totalorder %s18, 0
      %p152 = por %p150, %p151
      %s153 = ssub.s32 %s19, %s38
      %s154 = ssub.s32 %s20, %s34
      %s155 = sor.u32 %s153, %s154
      %p156 = scmp.eq.s32.totalorder %s155, 0
      %s158 = sadd.s32 %s157, 1
      %s159 = scalar_select %p156, %s157, %s158
      %p162 = pneg %p156
      %p163 = scmp.eq.s32.totalorder %s12, 23
      %p164 = por %p162, %p163
      %p165 = scmp.ne.s32.totalorder %s157, %s160
      %p166 = scmp.eq.s32.totalorder %s12, 0
      %p167 = por %p165, %p166
      %p168 = scmp.ne.s32.totalorder %s157, %s160
      %p169 = scmp.eq.s32.totalorder %s17, 23
      %p170 = por %p168, %p169
      %p171 = scmp.ne.s32.totalorder %s160, %s161
      %p172 = scmp.eq.s32.totalorder %s17, 0
      %p173 = por %p171, %p172
      %p174 = scmp.ne.s32.totalorder %s160, %s161
      %p175 = scmp.eq.s32.totalorder %s18, 23
      %p176 = por %p174, %p175
      %p178 = scmp.ne.s32.totalorder %s161, %s177
      %p179 = scmp.eq.s32.totalorder %s18, 0
      %p180 = por %p178, %p179
      %s181 = ssub.s32 %s19, %s38
      %s182 = ssub.s32 %s20, %s34
      %s183 = sor.u32 %s181, %s182
      %p184 = scmp.eq.s32.totalorder %s183, 0
      %s186 = sadd.s32 %s185, 1
      %s187 = scalar_select %p184, %s185, %s186
      %p190 = pneg %p184
      %p191 = scmp.eq.s32.totalorder %s12, 23
      %p192 = por %p190, %p191
      %p193 = scmp.ne.s32.totalorder %s185, %s188
      %p194 = scmp.eq.s32.totalorder %s12, 0
      %p195 = por %p193, %p194
      %p196 = scmp.ne.s32.totalorder %s185, %s188
      %p197 = scmp.eq.s32.totalorder %s17, 23
      %p198 = por %p196, %p197
      %p199 = scmp.ne.s32.totalorder %s188, %s189
      %p200 = scmp.eq.s32.totalorder %s17, 0
      %p201 = por %p199, %p200
      %p202 = scmp.ne.s32.totalorder %s188, %s189
      %p203 = scmp.eq.s32.totalorder %s18, 23
      %p204 = por %p202, %p203
      %p206 = scmp.ne.s32.totalorder %s189, %s205
      %p207 = scmp.eq.s32.totalorder %s18, 0
      %p208 = por %p206, %p207
      %p209 = scmp.le.s32.totalorder 1, %s12
      %p210 = scmp.lt.s32.totalorder %s12, 25
      %p211 = pnand %p209, %p210
      %p212 = pneg %p211
      // Predicated region
      $region9: #{basic_block_forward.3} parent=5 // pred_check
        _
      $region10: #{basic_block_forward.3} parent=5 // pred_check_branch
        %214 = sbr.rel (%p211) target = $region12
      $region11: #{basic_block_forward.3} parent=5 // pred_region
        %s215 = ssub.s32 %s12, 1
        // Predicated region
        $region13: #{basic_block_forward.3} parent=11 // pred_check
          %p216 = pneg %p82
        $region14: #{basic_block_forward.3} parent=11 // pred_check_branch
          %218 = sbr.rel (%p216) target = $region16
        $region15: #{basic_block_forward.3} parent=11 // pred_region
          _
        $region16: #{basic_block_forward.3} parent=11 // pred_fallthru
          _
        // Predicated region
        $region17: #{basic_block_forward.3} parent=11 // pred_check
          %p219 = pneg %p103
        $region18: #{basic_block_forward.3} parent=11 // pred_check_branch
          %221 = sbr.rel (%p219) target = $region20
        $region19: #{basic_block_forward.3} parent=11 // pred_region
          _
        $region20: #{basic_block_forward.3} parent=11 // pred_fallthru
          _
        // Predicated region
        $region21: #{basic_block_forward.3} parent=11 // pred_check
          %p222 = pneg %p124
        $region22: #{basic_block_forward.3} parent=11 // pred_check_branch
          %224 = sbr.rel (%p222) target = $region24
        $region23: #{basic_block_forward.3} parent=11 // pred_region
          _
        $region24: #{basic_block_forward.3} parent=11 // pred_fallthru
          _
        // Predicated region
        $region25: #{basic_block_forward.3} parent=11 // pred_check
          %p225 = pneg %p145
        $region26: #{basic_block_forward.3} parent=11 // pred_check_branch
          %227 = sbr.rel (%p225) target = $region28
        $region27: #{basic_block_forward.3} parent=11 // pred_region
          _
        $region28: #{basic_block_forward.3} parent=11 // pred_fallthru
          _
      $region12: #{basic_block_forward.3} parent=5 // pred_fallthru
        _
      %p228 = scmp.lt.s32.totalorder %s12, 24
      // Predicated region
      $region29: #{basic_block_forward.3} parent=5 // pred_check
        %p229 = pneg %p228
      $region30: #{basic_block_forward.3} parent=5 // pred_check_branch
        %231 = sbr.rel (%p229) target = $region32
      $region31: #{basic_block_forward.3} parent=5 // pred_region
        // Predicated region
        $region33: #{basic_block_forward.3} parent=31 // pred_check
          %p232 = pneg %p55
        $region34: #{basic_block_forward.3} parent=31 // pred_check_branch
          %234 = sbr.rel (%p232) target = $region36
        $region35: #{basic_block_forward.3} parent=31 // pred_region
          %s235 = sand.u32 %s45, 1
          %s236 = sand.u32 %s45, 1
          %s237 = smul.addr %s236, 16
          %s238 = scalar_lea.vmem [#allocation3], %s237
          %s239 = sadd.s32 %s20, %s21
          %s240 = smul.u32 2, %s19
          %s241 = smul.addr %s239, 2
          %s242 = smul.addr %s240, 20
          %s243 = sadd.s32 %s241, %s242
          %s244 = smul.addr %s243, 4
          %s245 = scalar_lea.vmem %s0, %s244
          // Predicated region
          $region37: #{basic_block_forward.3} parent=35 // pred_check
            _
          $region38: #{basic_block_forward.3} parent=35 // pred_check_branch
            %247 = sbr.rel (0) target = $region40
          $region39: #{basic_block_forward.3} parent=35 // pred_region
            // Predicated region
            $region41: #{basic_block_forward.3} parent=39 // pred_check
              _
            $region42: #{basic_block_forward.3} parent=39 // pred_check_branch
              %249 = sbr.rel target = $region44
            $region43: #{basic_block_forward.3} parent=39 // pred_region
              // Predicated region
              $region56: #{basic_block_forward.3} parent=43 // pred_check
                _
              $region57: #{basic_block_forward.3} parent=43 // pred_check_branch
                %271 = sbr.rel (0) target = $region59
              $region58: #{basic_block_forward.3} parent=43 // pred_region
                loop: start=0, step=1, limit=1
                $region60: #{basic_block_forward.3} parent=58 // loop_pre_header
                  _
                $region61: #{basic_block_forward.3} parent=58 // loop_header
                  %s273 = sphi 0, %s277
                  %p274 = scmp.ge.s32.totalorder %s273, 1
                  %s278 = sphi %s245, %s245
                  %s279 = sphi %s238, %s238
                $region62: #{basic_block_forward.3} parent=58 // loop_header_branch
                  %276 = sbr.rel (%p274) target = $region66
                $region63: #{basic_block_forward.3} parent=58 // loop_body
                  _
                $region64: #{basic_block_forward.3} parent=58 // loop_footer
                  %s277 = sadd.s32 1, %s273
                $region65: #{basic_block_forward.3} parent=58 // loop_footer_branch
                  %272 = sbr.rel target = $region61
                $region66: #{basic_block_forward.3} parent=58 // loop_exit
                  _
                %s281 = ssub.s32 16, 1
                loop: start=0, step=1, limit=1
                $region67: #{basic_block_forward.3} parent=58 // loop_pre_header
                  _
                $region68: #{basic_block_forward.3} parent=58 // loop_header
                  %s283 = sphi 0, %s287
                  %p284 = scmp.ge.s32.totalorder %s283, 1
                  %s288 = sphi %s245, %s245
                  %s289 = sphi %s238, %s238
                $region69: #{basic_block_forward.3} parent=58 // loop_header_branch
                  %286 = sbr.rel (%p284) target = $region73
                $region70: #{basic_block_forward.3} parent=58 // loop_body
                  %v290 = vld [vmem:[%s288] sm:%s281]
                  %291 = vst [vmem:[%s289] sm:%s281] %v290
                  %v292 = vld [vmem:[%s288 + $0x4] sm:%s281]
                  %293 = vst [vmem:[%s289 + $0x4] sm:%s281] %v292
                  %v294 = vld [vmem:[%s288 + $0x50] sm:%s281]
                  %295 = vst [vmem:[%s289 + $0x8] sm:%s281] %v294
                  %v296 = vld [vmem:[%s288 + $0x54] sm:%s281]
                  %297 = vst [vmem:[%s289 + $0xc] sm:%s281] %v296
                $region71: #{basic_block_forward.3} parent=58 // loop_footer
                  %s287 = sadd.s32 1, %s283
                $region72: #{basic_block_forward.3} parent=58 // loop_footer_branch
                  %282 = sbr.rel target = $region68
                $region73: #{basic_block_forward.3} parent=58 // loop_exit
                  _
              $region59: #{basic_block_forward.3} parent=43 // pred_fallthru
                _
            $region44: #{basic_block_forward.3} parent=39 // pred_fallthru
              _
            // Predicated region
            $region45: #{basic_block_forward.3} parent=39 // pred_check
              _
            $region46: #{basic_block_forward.3} parent=39 // pred_check_branch
              %251 = sbr.rel (0) target = $region48
            $region47: #{basic_block_forward.3} parent=39 // pred_region
              %s253 = ssub.s32 16, 1
              loop: start=0, step=1, limit=1
              $region49: #{basic_block_forward.3} parent=47 // loop_pre_header
                _
              $region50: #{basic_block_forward.3} parent=47 // loop_header
                %s255 = sphi 0, %s259
                %p256 = scmp.ge.s32.totalorder %s255, 1
                %s260 = sphi %s245, %s245
                %s261 = sphi %s238, %s238
              $region51: #{basic_block_forward.3} parent=47 // loop_header_branch
                %258 = sbr.rel (%p256) target = $region55
              $region52: #{basic_block_forward.3} parent=47 // loop_body
                %v262 = vld [vmem:[%s260] sm:%s253]
                %263 = vst [vmem:[%s261] sm:%s253] %v262
                %v264 = vld [vmem:[%s260 + $0x4] sm:%s253]
                %265 = vst [vmem:[%s261 + $0x4] sm:%s253] %v264
                %v266 = vld [vmem:[%s260 + $0x50] sm:%s253]
                %267 = vst [vmem:[%s261 + $0x8] sm:%s253] %v266
                %v268 = vld [vmem:[%s260 + $0x54] sm:%s253]
                %269 = vst [vmem:[%s261 + $0xc] sm:%s253] %v268
              $region53: #{basic_block_forward.3} parent=47 // loop_footer
                %s259 = sadd.s32 1, %s255
              $region54: #{basic_block_forward.3} parent=47 // loop_footer_branch
                %254 = sbr.rel target = $region50
              $region55: #{basic_block_forward.3} parent=47 // loop_exit
                _
            $region48: #{basic_block_forward.3} parent=39 // pred_fallthru
              _
          $region40: #{basic_block_forward.3} parent=35 // pred_fallthru
            _
          %298 = vnop
        $region36: #{basic_block_forward.3} parent=31 // pred_fallthru
          _
        // Predicated region
        $region74: #{basic_block_forward.3} parent=31 // pred_check
          %p299 = pneg %p167
        $region75: #{basic_block_forward.3} parent=31 // pred_check_branch
          %301 = sbr.rel (%p299) target = $region77
        $region76: #{basic_block_forward.3} parent=31 // pred_region
          %s302 = sand.u32 %s157, 1
          %s303 = sand.u32 %s157, 1
          %s304 = smul.addr %s303, 16
          %s305 = scalar_lea.vmem [#allocation4], %s304
          %s306 = smul.u32 2, %s19
          %s307 = smul.addr %s306, 8
          %s308 = sadd.s32 %s20, %s307
          %s309 = smul.addr %s308, 8
          %s310 = scalar_lea.vmem %s5, %s309
          // Predicated region
          $region78: #{basic_block_forward.3} parent=76 // pred_check
            _
          $region79: #{basic_block_forward.3} parent=76 // pred_check_branch
            %312 = sbr.rel (0) target = $region81
          $region80: #{basic_block_forward.3} parent=76 // pred_region
            // Predicated region
            $region82: #{basic_block_forward.3} parent=80 // pred_check
              _
            $region83: #{basic_block_forward.3} parent=80 // pred_check_branch
              %314 = sbr.rel (0) target = $region85
            $region84: #{basic_block_forward.3} parent=80 // pred_region
              // Predicated region
              $region97: #{basic_block_forward.3} parent=84 // pred_check
                _
              $region98: #{basic_block_forward.3} parent=84 // pred_check_branch
                %332 = sbr.rel (0) target = $region100
              $region99: #{basic_block_forward.3} parent=84 // pred_region
                loop: start=0, step=1, limit=1
                $region101: #{basic_block_forward.3} parent=99 // loop_pre_header
                  _
                $region102: #{basic_block_forward.3} parent=99 // loop_header
                  %s334 = sphi 0, %s338
                  %p335 = scmp.ge.s32.totalorder %s334, 1
                  %s339 = sphi %s310, %s310
                  %s340 = sphi %s305, %s305
                $region103: #{basic_block_forward.3} parent=99 // loop_header_branch
                  %337 = sbr.rel (%p335) target = $region107
                $region104: #{basic_block_forward.3} parent=99 // loop_body
                  %v341 = vld [vmem:[%s339] sm:$0xff]
                  %342 = vst [vmem:[%s340] sm:$0xff] %v341
                  %v343 = vld [vmem:[%s339 + $0x40] sm:$0xff]
                  %344 = vst [vmem:[%s340 + $0x8] sm:$0xff] %v343
                $region105: #{basic_block_forward.3} parent=99 // loop_footer
                  %s338 = sadd.s32 1, %s334
                $region106: #{basic_block_forward.3} parent=99 // loop_footer_branch
                  %333 = sbr.rel target = $region102
                $region107: #{basic_block_forward.3} parent=99 // loop_exit
                  _
              $region100: #{basic_block_forward.3} parent=84 // pred_fallthru
                _
              // Predicated region
              $region108: #{basic_block_forward.3} parent=84 // pred_check
                _
              $region109: #{basic_block_forward.3} parent=84 // pred_check_branch
                %346 = sbr.rel target = $region111
              $region110: #{basic_block_forward.3} parent=84 // pred_region
                _
              $region111: #{basic_block_forward.3} parent=84 // pred_fallthru
                _
            $region85: #{basic_block_forward.3} parent=80 // pred_fallthru
              _
            // Predicated region
            $region86: #{basic_block_forward.3} parent=80 // pred_check
              _
            $region87: #{basic_block_forward.3} parent=80 // pred_check_branch
              %316 = sbr.rel target = $region89
            $region88: #{basic_block_forward.3} parent=80 // pred_region
              %s318 = ssub.s32 256, 1
              loop: start=0, step=1, limit=1
              $region90: #{basic_block_forward.3} parent=88 // loop_pre_header
                _
              $region91: #{basic_block_forward.3} parent=88 // loop_header
                %s320 = sphi 0, %s324
                %p321 = scmp.ge.s32.totalorder %s320, 1
                %s325 = sphi %s310, %s310
                %s326 = sphi %s305, %s305
              $region92: #{basic_block_forward.3} parent=88 // loop_header_branch
                %323 = sbr.rel (%p321) target = $region96
              $region93: #{basic_block_forward.3} parent=88 // loop_body
                %v327 = vld [vmem:[%s325] sm:%s318]
                %328 = vst [vmem:[%s326] sm:%s318] %v327
                %v329 = vld [vmem:[%s325 + $0x40] sm:%s318]
                %330 = vst [vmem:[%s326 + $0x8] sm:%s318] %v329
              $region94: #{basic_block_forward.3} parent=88 // loop_footer
                %s324 = sadd.s32 1, %s320
              $region95: #{basic_block_forward.3} parent=88 // loop_footer_branch
                %319 = sbr.rel target = $region91
              $region96: #{basic_block_forward.3} parent=88 // loop_exit
                _
            $region89: #{basic_block_forward.3} parent=80 // pred_fallthru
              _
          $region81: #{basic_block_forward.3} parent=76 // pred_fallthru
            _
          %347 = vnop
        $region77: #{basic_block_forward.3} parent=31 // pred_fallthru
          _
      $region32: #{basic_block_forward.3} parent=5 // pred_fallthru
        _
      %p348 = scmp.le.s32.totalorder 1, %s12
      %p349 = scmp.lt.s32.totalorder %s12, 25
      %p350 = pnand %p348, %p349
      %p351 = pneg %p350
      // Predicated region
      $region112: #{basic_block_forward.3} parent=5 // pred_check
        _
      $region113: #{basic_block_forward.3} parent=5 // pred_check_branch
        %353 = sbr.rel (%p350) target = $region115
      $region114: #{basic_block_forward.3} parent=5 // pred_region
        %s354 = ssub.s32 %s12, 1
        %s355 = sand.u32 %s48, 1
        %s356 = sand.u32 %s48, 1
        %s357 = smul.addr %s356, 16
        %s358 = scalar_lea.vmem [#allocation3], %s357
        // Predicated region
        $region116: #{basic_block_forward.3} parent=114 // pred_check
          %p359 = pneg %p61
        $region117: #{basic_block_forward.3} parent=114 // pred_check_branch
          %361 = sbr.rel (%p359) target = $region119
        $region118: #{basic_block_forward.3} parent=114 // pred_region
          _
        $region119: #{basic_block_forward.3} parent=114 // pred_fallthru
          _
        %s362 = sand.u32 %s160, 1
        %s363 = sand.u32 %s160, 1
        %s364 = smul.addr %s363, 16
        %s365 = scalar_lea.vmem [#allocation4], %s364
        // Predicated region
        $region120: #{basic_block_forward.3} parent=114 // pred_check
          %p366 = pneg %p173
        $region121: #{basic_block_forward.3} parent=114 // pred_check_branch
          %368 = sbr.rel (%p366) target = $region123
        $region122: #{basic_block_forward.3} parent=114 // pred_region
          _
        $region123: #{basic_block_forward.3} parent=114 // pred_fallthru
          _
        %s369 = sand.u32 %s48, 1
        %s370 = sand.u32 %s48, 1
        %s371 = smul.addr %s370, 16
        %s372 = scalar_lea.vmem [#allocation3], %s371
        %p373 = pneg %p61
        %p374 = pneg %p58
        %p375 = pneg %p82
        %p376 = pneg %p79
        %p377 = pneg %p103
        %p378 = pneg %p100
        %p379 = pneg %p124
        %p380 = pneg %p121
        %p381 = pneg %p145
        %p382 = pneg %p142
        %s383 = sand.u32 %s160, 1
        %s384 = sand.u32 %s160, 1
        %s385 = smul.addr %s384, 16
        %s386 = scalar_lea.vmem [#allocation4], %s385
        %p387 = pneg %p173
        %p388 = pneg %p170
        %p389 = pneg %p201
        %p390 = pneg %p198
        %s391 = sand.u32 %s188, 1
        %s392 = sand.u32 %s188, 1
        %s393 = smul.addr %s392, 16
        %s394 = scalar_lea.vmem [#allocation5], %s393
        %s395 = sadd.s32 %s23, %s24
        %s396 = smul.u32 2, %s22
        %s397 = smul.u32 2, %s22
        %s398 = smul.u32 2, %s22
        %p399 = scmp.eq.s32.totalorder %s24, 0
        // Predicated region
        $region124: #{basic_block_forward.3} parent=114 // pred_check
          %p400 = pneg %p399
        $region125: #{basic_block_forward.3} parent=114 // pred_check_branch
          %402 = sbr.rel (%p400) target = $region127
        $region126: #{basic_block_forward.3} parent=114 // pred_region
          %403 = vst [vmem:[#allocation2] sm:$0xff] 0.0
          %404 = vst [vmem:[#allocation2 + $0x8] sm:$0xff] 0.0
        $region127: #{basic_block_forward.3} parent=114 // pred_fallthru
          _
        %v405 = vld [vmem:[%s358] sm:$0xf]
        %v406 = vld [vmem:[%s358 + $0x4] sm:$0x1]
        %s407 = smul.u32 %s24, 3
        %s408 = smul.u32 %s407, 16
        %s409 = smul.addr %s408, 4
        %s410 = scalar_lea.vmem %s1, %s409
        %v411 = vld [vmem:[%s410] sm:$0xf]
        %v412 = vld [vmem:[%s410 + $0x4] sm:$0xf]
        %v413 = vld [vmem:[%s410 + $0x8] sm:$0xf]
        %v414 = vld [vmem:[%s410 + $0xc] sm:$0xf]
        %v415 = vld [vmem:[%s410 + $0x10] sm:$0xf]
        %v416 = vld [vmem:[%s410 + $0x14] sm:$0xf]
        %v417 = vld [vmem:[%s410 + $0x18] sm:$0xf]
        %v418 = vld [vmem:[%s410 + $0x1c] sm:$0xf]
        %v419 = vld [vmem:[%s410 + $0x20] sm:$0xf]
        %v420 = vld [vmem:[%s410 + $0x24] sm:$0xf]
        %v421 = vld [vmem:[%s410 + $0x28] sm:$0xf]
        %v422 = vld [vmem:[%s410 + $0x2c] sm:$0xf]
        %v423 = vld [vmem:[%s410 + $0x30] sm:$0xf]
        %v424 = vld [vmem:[%s410 + $0x34] sm:$0xf]
        %v425 = vld [vmem:[%s410 + $0x38] sm:$0xf]
        %v426 = vld [vmem:[%s410 + $0x3c] sm:$0xf]
        %s427 = sadd.s32 %s407, 1
        %s428 = smul.u32 %s427, 16
        %s429 = smul.addr %s428, 4
        %s430 = scalar_lea.vmem %s1, %s429
        %v431 = vld [vmem:[%s430] sm:$0xf]
        %v432 = vld [vmem:[%s430 + $0x4] sm:$0xf]
        %v433 = vld [vmem:[%s430 + $0x8] sm:$0xf]
        %v434 = vld [vmem:[%s430 + $0xc] sm:$0xf]
        %v435 = vld [vmem:[%s430 + $0x10] sm:$0xf]
        %v436 = vld [vmem:[%s430 + $0x14] sm:$0xf]
        %v437 = vld [vmem:[%s430 + $0x18] sm:$0xf]
        %v438 = vld [vmem:[%s430 + $0x1c] sm:$0xf]
        %v439 = vld [vmem:[%s430 + $0x20] sm:$0xf]
        %v440 = vld [vmem:[%s430 + $0x24] sm:$0xf]
        %v441 = vld [vmem:[%s430 + $0x28] sm:$0xf]
        %v442 = vld [vmem:[%s430 + $0x2c] sm:$0xf]
        %v443 = vld [vmem:[%s430 + $0x30] sm:$0xf]
        %v444 = vld [vmem:[%s430 + $0x34] sm:$0xf]
        %v445 = vld [vmem:[%s430 + $0x38] sm:$0xf]
        %v446 = vld [vmem:[%s430 + $0x3c] sm:$0xf]
        %v449 = vunpack.c.l.b16 %v405
        %v450 = vunpack.c.l.b16 %v406
        %v451 = vpack.c.b16 %v450, %v449
        %v453 = vshrl.u32 %v451, 16
        %v455 = vshll.u32 %v451, 16
        %v457 = vrot.slane %v455, 1
        %v458 = vor.u32 %v453, %v457
        %v476 = vunpack.c.l.b16 %v431
        %v477 = vunpack.c.l.b16 %v432
        %v478 = vunpack.c.l.b16 %v433
        %v479 = vunpack.c.l.b16 %v434
        %v480 = vunpack.c.l.b16 %v435
        %v481 = vunpack.c.l.b16 %v436
        %v482 = vunpack.c.l.b16 %v437
        %v483 = vunpack.c.l.b16 %v438
        %v484 = vunpack.c.l.b16 %v439
        %v485 = vunpack.c.l.b16 %v440
        %v486 = vunpack.c.l.b16 %v441
        %v487 = vunpack.c.l.b16 %v442
        %v488 = vunpack.c.l.b16 %v443
        %v489 = vunpack.c.l.b16 %v444
        %v490 = vunpack.c.l.b16 %v445
        %v491 = vunpack.c.l.b16 %v446
        %v492 = vpack.c.b16 %v477, %v476
        %v493 = vpack.c.b16 %v479, %v478
        %v494 = vpack.c.b16 %v481, %v480
        %v495 = vpack.c.b16 %v483, %v482
        %v496 = vpack.c.b16 %v485, %v484
        %v497 = vpack.c.b16 %v487, %v486
        %v498 = vpack.c.b16 %v489, %v488
        %v499 = vpack.c.b16 %v491, %v490
        %508 = vmatpush.bf16.msra.mxu0 %v499
        %509 = vmatpush.bf16.msra.mxu0 %v498
        %510 = vmatpush.bf16.msra.mxu0 %v497
        %511 = vmatpush.bf16.msra.mxu0 %v496
        %512 = vmatpush.bf16.msra.mxu0 %v495
        %513 = vmatpush.bf16.msra.mxu0 %v494
        %514 = vmatpush.bf16.msra.mxu0 %v493
        %515 = vmatpush.bf16.msra.mxu0 %v492
        %516 = vmatmul.bf16.gmra.mxu0 %v458
        %v517 = vpop.f32.mrf.mxu0
        %v518 = vadd.f32 0.0, %v517
        %v519 = vpop.f32.mrf.mxu0
        %520 = vdwg.mxu0
        %v537 = vunpack.c.l.b16 %v411
        %v538 = vunpack.c.l.b16 %v412
        %v539 = vunpack.c.l.b16 %v413
        %v540 = vunpack.c.l.b16 %v414
        %v541 = vunpack.c.l.b16 %v415
        %v542 = vunpack.c.l.b16 %v416
        %v543 = vunpack.c.l.b16 %v417
        %v544 = vunpack.c.l.b16 %v418
        %v545 = vunpack.c.l.b16 %v419
        %v546 = vunpack.c.l.b16 %v420
        %v547 = vunpack.c.l.b16 %v421
        %v548 = vunpack.c.l.b16 %v422
        %v549 = vunpack.c.l.b16 %v423
        %v550 = vunpack.c.l.b16 %v424
        %v551 = vunpack.c.l.b16 %v425
        %v552 = vunpack.c.l.b16 %v426
        %v553 = vpack.c.b16 %v538, %v537
        %v554 = vpack.c.b16 %v540, %v539
        %v555 = vpack.c.b16 %v542, %v541
        %v556 = vpack.c.b16 %v544, %v543
        %v557 = vpack.c.b16 %v546, %v545
        %v558 = vpack.c.b16 %v548, %v547
        %v559 = vpack.c.b16 %v550, %v549
        %v560 = vpack.c.b16 %v552, %v551
        %569 = vmatpush.bf16.msra.mxu0 %v560
        %570 = vmatpush.bf16.msra.mxu0 %v559
        %571 = vmatpush.bf16.msra.mxu0 %v558
        %572 = vmatpush.bf16.msra.mxu0 %v557
        %573 = vmatpush.bf16.msra.mxu0 %v556
        %574 = vmatpush.bf16.msra.mxu0 %v555
        %575 = vmatpush.bf16.msra.mxu0 %v554
        %576 = vmatpush.bf16.msra.mxu0 %v553
        %577 = vmatmul.bf16.gmra.mxu0 %v405
        %v578 = vpop.f32.mrf.mxu0
        %v579 = vadd.f32 %v518, %v578
        %v580 = vpop.f32.mrf.mxu0
        %581 = vdwg.mxu0
        %s582 = sadd.s32 %s407, 2
        %s583 = smul.u32 %s582, 16
        %s584 = smul.addr %s583, 4
        %s585 = scalar_lea.vmem %s1, %s584
        %v586 = vld [vmem:[%s585] sm:$0xf]
        %v587 = vld [vmem:[%s585 + $0x4] sm:$0xf]
        %v588 = vld [vmem:[%s585 + $0x8] sm:$0xf]
        %v589 = vld [vmem:[%s585 + $0xc] sm:$0xf]
        %v590 = vld [vmem:[%s585 + $0x10] sm:$0xf]
        %v591 = vld [vmem:[%s585 + $0x14] sm:$0xf]
        %v592 = vld [vmem:[%s585 + $0x18] sm:$0xf]
        %v593 = vld [vmem:[%s585 + $0x1c] sm:$0xf]
        %v594 = vld [vmem:[%s585 + $0x20] sm:$0xf]
        %v595 = vld [vmem:[%s585 + $0x24] sm:$0xf]
        %v596 = vld [vmem:[%s585 + $0x28] sm:$0xf]
        %v597 = vld [vmem:[%s585 + $0x2c] sm:$0xf]
        %v598 = vld [vmem:[%s585 + $0x30] sm:$0xf]
        %v599 = vld [vmem:[%s585 + $0x34] sm:$0xf]
        %v600 = vld [vmem:[%s585 + $0x38] sm:$0xf]
        %v601 = vld [vmem:[%s585 + $0x3c] sm:$0xf]
        %v602 = vrot.slane %v451, 1
        %v620 = vunpack.c.l.b16 %v586
        %v621 = vunpack.c.l.b16 %v587
        %v622 = vunpack.c.l.b16 %v588
        %v623 = vunpack.c.l.b16 %v589
        %v624 = vunpack.c.l.b16 %v590
        %v625 = vunpack.c.l.b16 %v591
        %v626 = vunpack.c.l.b16 %v592
        %v627 = vunpack.c.l.b16 %v593
        %v628 = vunpack.c.l.b16 %v594
        %v629 = vunpack.c.l.b16 %v595
        %v630 = vunpack.c.l.b16 %v596
        %v631 = vunpack.c.l.b16 %v597
        %v632 = vunpack.c.l.b16 %v598
        %v633 = vunpack.c.l.b16 %v599
        %v634 = vunpack.c.l.b16 %v600
        %v635 = vunpack.c.l.b16 %v601
        %v636 = vpack.c.b16 %v621, %v620
        %v637 = vpack.c.b16 %v623, %v622
        %v638 = vpack.c.b16 %v625, %v624
        %v639 = vpack.c.b16 %v627, %v626
        %v640 = vpack.c.b16 %v629, %v628
        %v641 = vpack.c.b16 %v631, %v630
        %v642 = vpack.c.b16 %v633, %v632
        %v643 = vpack.c.b16 %v635, %v634
        %652 = vmatpush.bf16.msra.mxu0 %v643
        %653 = vmatpush.bf16.msra.mxu0 %v642
        %654 = vmatpush.bf16.msra.mxu0 %v641
        %655 = vmatpush.bf16.msra.mxu0 %v640
        %656 = vmatpush.bf16.msra.mxu0 %v639
        %657 = vmatpush.bf16.msra.mxu0 %v638
        %658 = vmatpush.bf16.msra.mxu0 %v637
        %659 = vmatpush.bf16.msra.mxu0 %v636
        %660 = vmatmul.bf16.gmra.mxu0 %v602
        %v661 = vpop.f32.mrf.mxu0
        %v662 = vadd.f32 0.0, %v661
        %v663 = vpop.f32.mrf.mxu0
        %664 = vdwg.mxu0
        %v665 = vadd.f32 %v579, %v662
        %v666 = vld [vmem:[#allocation2] sm:$0xff]
        %v667 = vadd.f32 %v666, %v665
        %668 = vst [vmem:[#allocation2] sm:$0xff] %v667
        %s669 = scalar_lea.vmem %s358, 8 [#allocation3]
        %v670 = vld [vmem:[%s669] sm:$0xf]
        %v671 = vld [vmem:[%s669 + $0x4] sm:$0x1]
        %v672 = vld [vmem:[%s410] sm:$0xf]
        %v673 = vld [vmem:[%s410 + $0x4] sm:$0xf]
        %v674 = vld [vmem:[%s410 + $0x8] sm:$0xf]
        %v675 = vld [vmem:[%s410 + $0xc] sm:$0xf]
        %v676 = vld [vmem:[%s410 + $0x10] sm:$0xf]
        %v677 = vld [vmem:[%s410 + $0x14] sm:$0xf]
        %v678 = vld [vmem:[%s410 + $0x18] sm:$0xf]
        %v679 = vld [vmem:[%s410 + $0x1c] sm:$0xf]
        %v680 = vld [vmem:[%s410 + $0x20] sm:$0xf]
        %v681 = vld [vmem:[%s410 + $0x24] sm:$0xf]
        %v682 = vld [vmem:[%s410 + $0x28] sm:$0xf]
        %v683 = vld [vmem:[%s410 + $0x2c] sm:$0xf]
        %v684 = vld [vmem:[%s410 + $0x30] sm:$0xf]
        %v685 = vld [vmem:[%s410 + $0x34] sm:$0xf]
        %v686 = vld [vmem:[%s410 + $0x38] sm:$0xf]
        %v687 = vld [vmem:[%s410 + $0x3c] sm:$0xf]
        %v688 = vld [vmem:[%s430] sm:$0xf]
        %v689 = vld [vmem:[%s430 + $0x4] sm:$0xf]
        %v690 = vld [vmem:[%s430 + $0x8] sm:$0xf]
        %v691 = vld [vmem:[%s430 + $0xc] sm:$0xf]
        %v692 = vld [vmem:[%s430 + $0x10] sm:$0xf]
        %v693 = vld [vmem:[%s430 + $0x14] sm:$0xf]
        %v694 = vld [vmem:[%s430 + $0x18] sm:$0xf]
        %v695 = vld [vmem:[%s430 + $0x1c] sm:$0xf]
        %v696 = vld [vmem:[%s430 + $0x20] sm:$0xf]
        %v697 = vld [vmem:[%s430 + $0x24] sm:$0xf]
        %v698 = vld [vmem:[%s430 + $0x28] sm:$0xf]
        %v699 = vld [vmem:[%s430 + $0x2c] sm:$0xf]
        %v700 = vld [vmem:[%s430 + $0x30] sm:$0xf]
        %v701 = vld [vmem:[%s430 + $0x34] sm:$0xf]
        %v702 = vld [vmem:[%s430 + $0x38] sm:$0xf]
        %v703 = vld [vmem:[%s430 + $0x3c] sm:$0xf]
        %v706 = vunpack.c.l.b16 %v670
        %v707 = vunpack.c.l.b16 %v671
        %v708 = vpack.c.b16 %v707, %v706
        %v710 = vshrl.u32 %v708, 16
        %v712 = vshll.u32 %v708, 16
        %v714 = vrot.slane %v712, 1
        %v715 = vor.u32 %v710, %v714
        %v733 = vunpack.c.l.b16 %v688
        %v734 = vunpack.c.l.b16 %v689
        %v735 = vunpack.c.l.b16 %v690
        %v736 = vunpack.c.l.b16 %v691
        %v737 = vunpack.c.l.b16 %v692
        %v738 = vunpack.c.l.b16 %v693
        %v739 = vunpack.c.l.b16 %v694
        %v740 = vunpack.c.l.b16 %v695
        %v741 = vunpack.c.l.b16 %v696
        %v742 = vunpack.c.l.b16 %v697
        %v743 = vunpack.c.l.b16 %v698
        %v744 = vunpack.c.l.b16 %v699
        %v745 = vunpack.c.l.b16 %v700
        %v746 = vunpack.c.l.b16 %v701
        %v747 = vunpack.c.l.b16 %v702
        %v748 = vunpack.c.l.b16 %v703
        %v749 = vpack.c.b16 %v734, %v733
        %v750 = vpack.c.b16 %v736, %v735
        %v751 = vpack.c.b16 %v738, %v737
        %v752 = vpack.c.b16 %v740, %v739
        %v753 = vpack.c.b16 %v742, %v741
        %v754 = vpack.c.b16 %v744, %v743
        %v755 = vpack.c.b16 %v746, %v745
        %v756 = vpack.c.b16 %v748, %v747
        %765 = vmatpush.bf16.msra.mxu0 %v756
        %766 = vmatpush.bf16.msra.mxu0 %v755
        %767 = vmatpush.bf16.msra.mxu0 %v754
        %768 = vmatpush.bf16.msra.mxu0 %v753
        %769 = vmatpush.bf16.msra.mxu0 %v752
        %770 = vmatpush.bf16.msra.mxu0 %v751
        %771 = vmatpush.bf16.msra.mxu0 %v750
        %772 = vmatpush.bf16.msra.mxu0 %v749
        %773 = vmatmul.bf16.gmra.mxu0 %v715
        %v774 = vpop.f32.mrf.mxu0
        %v775 = vadd.f32 0.0, %v774
        %v776 = vpop.f32.mrf.mxu0
        %777 = vdwg.mxu0
        %v794 = vunpack.c.l.b16 %v672
        %v795 = vunpack.c.l.b16 %v673
        %v796 = vunpack.c.l.b16 %v674
        %v797 = vunpack.c.l.b16 %v675
        %v798 = vunpack.c.l.b16 %v676
        %v799 = vunpack.c.l.b16 %v677
        %v800 = vunpack.c.l.b16 %v678
        %v801 = vunpack.c.l.b16 %v679
        %v802 = vunpack.c.l.b16 %v680
        %v803 = vunpack.c.l.b16 %v681
        %v804 = vunpack.c.l.b16 %v682
        %v805 = vunpack.c.l.b16 %v683
        %v806 = vunpack.c.l.b16 %v684
        %v807 = vunpack.c.l.b16 %v685
        %v808 = vunpack.c.l.b16 %v686
        %v809 = vunpack.c.l.b16 %v687
        %v810 = vpack.c.b16 %v795, %v794
        %v811 = vpack.c.b16 %v797, %v796
        %v812 = vpack.c.b16 %v799, %v798
        %v813 = vpack.c.b16 %v801, %v800
        %v814 = vpack.c.b16 %v803, %v802
        %v815 = vpack.c.b16 %v805, %v804
        %v816 = vpack.c.b16 %v807, %v806
        %v817 = vpack.c.b16 %v809, %v808
        %826 = vmatpush.bf16.msra.mxu0 %v817
        %827 = vmatpush.bf16.msra.mxu0 %v816
        %828 = vmatpush.bf16.msra.mxu0 %v815
        %829 = vmatpush.bf16.msra.mxu0 %v814
        %830 = vmatpush.bf16.msra.mxu0 %v813
        %831 = vmatpush.bf16.msra.mxu0 %v812
        %832 = vmatpush.bf16.msra.mxu0 %v811
        %833 = vmatpush.bf16.msra.mxu0 %v810
        %834 = vmatmul.bf16.gmra.mxu0 %v670
        %v835 = vpop.f32.mrf.mxu0
        %v836 = vadd.f32 %v775, %v835
        %v837 = vpop.f32.mrf.mxu0
        %838 = vdwg.mxu0
        %v839 = vld [vmem:[%s585] sm:$0xf]
        %v840 = vld [vmem:[%s585 + $0x4] sm:$0xf]
        %v841 = vld [vmem:[%s585 + $0x8] sm:$0xf]
        %v842 = vld [vmem:[%s585 + $0xc] sm:$0xf]
        %v843 = vld [vmem:[%s585 + $0x10] sm:$0xf]
        %v844 = vld [vmem:[%s585 + $0x14] sm:$0xf]
        %v845 = vld [vmem:[%s585 + $0x18] sm:$0xf]
        %v846 = vld [vmem:[%s585 + $0x1c] sm:$0xf]
        %v847 = vld [vmem:[%s585 + $0x20] sm:$0xf]
        %v848 = vld [vmem:[%s585 + $0x24] sm:$0xf]
        %v849 = vld [vmem:[%s585 + $0x28] sm:$0xf]
        %v850 = vld [vmem:[%s585 + $0x2c] sm:$0xf]
        %v851 = vld [vmem:[%s585 + $0x30] sm:$0xf]
        %v852 = vld [vmem:[%s585 + $0x34] sm:$0xf]
        %v853 = vld [vmem:[%s585 + $0x38] sm:$0xf]
        %v854 = vld [vmem:[%s585 + $0x3c] sm:$0xf]
        %v855 = vrot.slane %v708, 1
        %v873 = vunpack.c.l.b16 %v839
        %v874 = vunpack.c.l.b16 %v840
        %v875 = vunpack.c.l.b16 %v841
        %v876 = vunpack.c.l.b16 %v842
        %v877 = vunpack.c.l.b16 %v843
        %v878 = vunpack.c.l.b16 %v844
        %v879 = vunpack.c.l.b16 %v845
        %v880 = vunpack.c.l.b16 %v846
        %v881 = vunpack.c.l.b16 %v847
        %v882 = vunpack.c.l.b16 %v848
        %v883 = vunpack.c.l.b16 %v849
        %v884 = vunpack.c.l.b16 %v850
        %v885 = vunpack.c.l.b16 %v851
        %v886 = vunpack.c.l.b16 %v852
        %v887 = vunpack.c.l.b16 %v853
        %v888 = vunpack.c.l.b16 %v854
        %v889 = vpack.c.b16 %v874, %v873
        %v890 = vpack.c.b16 %v876, %v875
        %v891 = vpack.c.b16 %v878, %v877
        %v892 = vpack.c.b16 %v880, %v879
        %v893 = vpack.c.b16 %v882, %v881
        %v894 = vpack.c.b16 %v884, %v883
        %v895 = vpack.c.b16 %v886, %v885
        %v896 = vpack.c.b16 %v888, %v887
        %905 = vmatpush.bf16.msra.mxu0 %v896
        %906 = vmatpush.bf16.msra.mxu0 %v895
        %907 = vmatpush.bf16.msra.mxu0 %v894
        %908 = vmatpush.bf16.msra.mxu0 %v893
        %909 = vmatpush.bf16.msra.mxu0 %v892
        %910 = vmatpush.bf16.msra.mxu0 %v891
        %911 = vmatpush.bf16.msra.mxu0 %v890
        %912 = vmatpush.bf16.msra.mxu0 %v889
        %913 = vmatmul.bf16.gmra.mxu0 %v855
        %v914 = vpop.f32.mrf.mxu0
        %v915 = vadd.f32 0.0, %v914
        %v916 = vpop.f32.mrf.mxu0
        %917 = vdwg.mxu0
        %v918 = vadd.f32 %v836, %v915
        %s919 = scalar_lea.vmem [#allocation2], 8
        %v920 = vld [vmem:[%s919] sm:$0xff]
        %v921 = vadd.f32 %v920, %v918
        %922 = vst [vmem:[%s919] sm:$0xff] %v921
        %p923 = scmp.eq.s32.totalorder %s24, 2
        // Predicated region
        $region128: #{basic_block_forward.3} parent=114 // pred_check
          %p924 = pneg %p923
        $region129: #{basic_block_forward.3} parent=114 // pred_check_branch
          %926 = sbr.rel (%p924) target = $region131
        $region130: #{basic_block_forward.3} parent=114 // pred_region
          %v927 = vld [vmem:[#allocation2] sm:$0xff]
          %v928 = vld [vmem:[#allocation2 + $0x8] sm:$0xff]
          %vm929 = vcmp.ge.f32.partialorder %v927, 0.0
          %vm930 = vcmp.ge.f32.partialorder %v928, 0.0
          %v931 = vld [vmem:[%s2] sm:$0x1]
          %v933 = vperm.slane %v931, 0
          %v935 = vmul.f32 %v933, %v927
          %v936 = vmul.f32 %v933, %v928
          %v937 = vsel %vm929, %v927, %v935
          %v938 = vsel %vm930, %v928, %v936
          %v939 = vld [vmem:[%s3] sm:$0x1]
          %v941 = vperm.slane %v939, 0
          %v943 = vmul.f32 %v937, %v941
          %v944 = vmul.f32 %v938, %v941
          %v945 = vld [vmem:[%s4] sm:$0x1]
          %v947 = vperm.slane %v945, 0
          %v949 = vadd.f32 %v943, %v947
          %v950 = vadd.f32 %v944, %v947
          %v951 = vld [vmem:[%s365] sm:$0xff]
          %v952 = vld [vmem:[%s365 + $0x8] sm:$0xff]
          %v953 = vadd.f32 %v949, %v951
          %v954 = vadd.f32 %v950, %v952
          %955 = vst [vmem:[%s394] sm:$0xff] %v953
          %956 = vst [vmem:[%s394 + $0x8] sm:$0xff] %v954
        $region131: #{basic_block_forward.3} parent=114 // pred_fallthru
          _
        %s957 = sand.u32 %s188, 1
        %s958 = sand.u32 %s188, 1
        %s959 = smul.addr %s958, 16
        %s960 = scalar_lea.vmem [#allocation5], %s959
        // Predicated region
        $region132: #{basic_block_forward.3} parent=114 // pred_check
          %p961 = pneg %p198
        $region133: #{basic_block_forward.3} parent=114 // pred_check_branch
          %963 = sbr.rel (%p961) target = $region135
        $region134: #{basic_block_forward.3} parent=114 // pred_region
          %s964 = smul.u32 2, %s22
          %s965 = smul.addr %s964, 8
          %s966 = sadd.s32 %s23, %s965
          %s967 = smul.addr %s966, 8
          %s968 = scalar_lea.vmem %s6, %s967
          // Predicated region
          $region136: #{basic_block_forward.3} parent=134 // pred_check
            _
          $region137: #{basic_block_forward.3} parent=134 // pred_check_branch
            %970 = sbr.rel (0) target = $region139
          $region138: #{basic_block_forward.3} parent=134 // pred_region
            // Predicated region
            $region140: #{basic_block_forward.3} parent=138 // pred_check
              _
            $region141: #{basic_block_forward.3} parent=138 // pred_check_branch
              %972 = sbr.rel (0) target = $region143
            $region142: #{basic_block_forward.3} parent=138 // pred_region
              // Predicated region
              $region155: #{basic_block_forward.3} parent=142 // pred_check
                _
              $region156: #{basic_block_forward.3} parent=142 // pred_check_branch
                %990 = sbr.rel (0) target = $region158
              $region157: #{basic_block_forward.3} parent=142 // pred_region
                loop: start=0, step=1, limit=1
                $region159: #{basic_block_forward.3} parent=157 // loop_pre_header
                  _
                $region160: #{basic_block_forward.3} parent=157 // loop_header
                  %s992 = sphi 0, %s996
                  %p993 = scmp.ge.s32.totalorder %s992, 1
                  %s997 = sphi %s960, %s960
                  %s998 = sphi %s968, %s968
                $region161: #{basic_block_forward.3} parent=157 // loop_header_branch
                  %995 = sbr.rel (%p993) target = $region165
                $region162: #{basic_block_forward.3} parent=157 // loop_body
                  %v999 = vld [vmem:[%s997] sm:$0xff]
                  %1000 = vst [vmem:[%s998] sm:$0xff] %v999
                  %v1001 = vld [vmem:[%s997 + $0x8] sm:$0xff]
                  %1002 = vst [vmem:[%s998 + $0x40] sm:$0xff] %v1001
                $region163: #{basic_block_forward.3} parent=157 // loop_footer
                  %s996 = sadd.s32 1, %s992
                $region164: #{basic_block_forward.3} parent=157 // loop_footer_branch
                  %991 = sbr.rel target = $region160
                $region165: #{basic_block_forward.3} parent=157 // loop_exit
                  _
              $region158: #{basic_block_forward.3} parent=142 // pred_fallthru
                _
              // Predicated region
              $region166: #{basic_block_forward.3} parent=142 // pred_check
                _
              $region167: #{basic_block_forward.3} parent=142 // pred_check_branch
                %1004 = sbr.rel target = $region169
              $region168: #{basic_block_forward.3} parent=142 // pred_region
                _
              $region169: #{basic_block_forward.3} parent=142 // pred_fallthru
                _
            $region143: #{basic_block_forward.3} parent=138 // pred_fallthru
              _
            // Predicated region
            $region144: #{basic_block_forward.3} parent=138 // pred_check
              _
            $region145: #{basic_block_forward.3} parent=138 // pred_check_branch
              %974 = sbr.rel target = $region147
            $region146: #{basic_block_forward.3} parent=138 // pred_region
              %s976 = ssub.s32 256, 1
              loop: start=0, step=1, limit=1
              $region148: #{basic_block_forward.3} parent=146 // loop_pre_header
                _
              $region149: #{basic_block_forward.3} parent=146 // loop_header
                %s978 = sphi 0, %s982
                %p979 = scmp.ge.s32.totalorder %s978, 1
                %s983 = sphi %s960, %s960
                %s984 = sphi %s968, %s968
              $region150: #{basic_block_forward.3} parent=146 // loop_header_branch
                %981 = sbr.rel (%p979) target = $region154
              $region151: #{basic_block_forward.3} parent=146 // loop_body
                %v985 = vld [vmem:[%s983] sm:%s976]
                %986 = vst [vmem:[%s984] sm:%s976] %v985
                %v987 = vld [vmem:[%s983 + $0x8] sm:%s976]
                %988 = vst [vmem:[%s984 + $0x40] sm:%s976] %v987
              $region152: #{basic_block_forward.3} parent=146 // loop_footer
                %s982 = sadd.s32 1, %s978
              $region153: #{basic_block_forward.3} parent=146 // loop_footer_branch
                %977 = sbr.rel target = $region149
              $region154: #{basic_block_forward.3} parent=146 // loop_exit
                _
            $region147: #{basic_block_forward.3} parent=138 // pred_fallthru
              _
          $region139: #{basic_block_forward.3} parent=134 // pred_fallthru
            _
          %1005 = vnop
        $region135: #{basic_block_forward.3} parent=114 // pred_fallthru
          _
      $region115: #{basic_block_forward.3} parent=5 // pred_fallthru
        _
      %p1006 = scmp.le.s32.totalorder 2, %s12
      // Predicated region
      $region170: #{basic_block_forward.3} parent=5 // pred_check
        %p1007 = pneg %p1006
      $region171: #{basic_block_forward.3} parent=5 // pred_check_branch
        %1009 = sbr.rel (%p1007) target = $region173
      $region172: #{basic_block_forward.3} parent=5 // pred_region
        %s1010 = ssub.s32 %s12, 2
        // Predicated region
        $region174: #{basic_block_forward.3} parent=172 // pred_check
          %p1011 = pneg %p204
        $region175: #{basic_block_forward.3} parent=172 // pred_check_branch
          %1013 = sbr.rel (%p1011) target = $region177
        $region176: #{basic_block_forward.3} parent=172 // pred_region
          %s1014 = sand.u32 %s189, 1
          %s1015 = sand.u32 %s189, 1
          %s1016 = smul.addr %s1015, 16
          %s1017 = scalar_lea.vmem [#allocation5], %s1016
        $region177: #{basic_block_forward.3} parent=172 // pred_fallthru
          _
      $region173: #{basic_block_forward.3} parent=5 // pred_fallthru
        _
    $region6: #{basic_block_forward.3} parent=1 // loop_footer
      %s16 = sadd.s32 1, %s12
    $region7: #{basic_block_forward.3} parent=1 // loop_footer_branch
      %11 = sbr.rel target = $region3
    $region8: #{basic_block_forward.3} parent=1 // loop_exit
      _

</llo_original>
